<compile_context>
chip_gen: v6e
topology: v6e:2x2x1
jax: 0.10.0
libtpu: 0.0.40
codegen_flags: <defaults>
</compile_context>

<pallas_src>
import functools

import jax
import jax.numpy as jnp
from jax.experimental import pallas as pl
from jax.experimental.pallas import tpu as pltpu


def _mha_kernel(x_ref, wq_ref, wk_ref, wv_ref, o_ref, *, n_heads, head_dim, masked):
    # x_ref  : (bt, T, C)   -- native layout, one batch tile
    # w*_ref : (C, C) bf16  -- block-diagonal, pre-transposed projection weights
    # o_ref  : (bt, T, C)
    bt, T, C = x_ref.shape
    H, hd = n_heads, head_dim

    # Fold batch into the matmul M dim; bf16 operands for the MXU.
    xb = x_ref[...].reshape(bt * T, C).astype(jnp.bfloat16)

    # Fused block-diagonal projections (1/sqrt(hd) already folded into wq).
    # Cast to bf16 as produced to halve the live activation footprint.
    qb = jnp.dot(xb, wq_ref[...], preferred_element_type=jnp.float32).astype(jnp.bfloat16)
    kb = jnp.dot(xb, wk_ref[...], preferred_element_type=jnp.float32).astype(jnp.bfloat16)
    vb = jnp.dot(xb, wv_ref[...], preferred_element_type=jnp.float32).astype(jnp.bfloat16)

    # (bt*T, C) -> (bt*H, T, hd): heads become a dot_general batch dim.
    def to_heads(y):
        return y.reshape(bt, T, H, hd).transpose(0, 2, 1, 3).reshape(bt * H, T, hd)

    q3, k3, v3 = to_heads(qb), to_heads(kb), to_heads(vb)

    # Batched scores: contract head_dim, batch over (bt*H); no explicit k.T.
    s = jax.lax.dot_general(
        q3, k3, (((2,), (2,)), ((0,), (0,))),
        preferred_element_type=jnp.float32)                     # (bt*H, T, T) f32

    if masked:
        row = jax.lax.broadcasted_iota(jnp.int32, (T, T), 0)
        col = jax.lax.broadcasted_iota(jnp.int32, (T, T), 1)
        # large finite negative instead of -inf (safe in f32; diag is unmasked)
        s = jnp.where((col <= row)[None], s, jnp.float32(-1e30))

    # Softmax over the last axis, all in f32 (VPU/EUP math).
    m = jnp.max(s, axis=-1, keepdims=True)
    e = jnp.exp(s - m)
    denom = jnp.sum(e, axis=-1, keepdims=True)
    p = (e * pl.reciprocal(denom, approx=True)).astype(jnp.bfloat16)

    # Batched p @ v: (bt*H, T, T) x (bt*H, T, hd) -> (bt*H, T, hd), f32 acc.
    o3 = jax.lax.dot_general(
        p, v3, (((2,), (1,)), ((0,), (0,))),
        preferred_element_type=jnp.float32)

    # (bt*H, T, hd) -> (bt, T, C): single lane-dense slab store.
    o = o3.reshape(bt, H, T, hd).transpose(0, 2, 1, 3).reshape(bt, T, C)
    o_ref[...] = o.astype(o_ref.dtype)


def _block_diag_transposed(w, scale=1.0):
    """(H, hd, hd) per-head weights -> (C, C) blockdiag of scale * W_h.T (bf16)."""
    H, hd, _ = w.shape
    C = H * hd
    bd = jnp.zeros((C, C), dtype=jnp.float32)
    for h in range(H):
        bd = bd.at[h * hd:(h + 1) * hd, h * hd:(h + 1) * hd].set(scale * w[h].T)
    return bd.astype(jnp.bfloat16)


def _vmem_capacity_bytes():
    try:
        return int(pltpu.get_tpu_info().vmem_capacity_bytes)
    except Exception:
        return 64 * 1024 * 1024   # conservative fallback (v7x per-TC VMEM)


def _step_vmem_bytes(bt, T, C, H, in_itemsize, out_itemsize):
    """Rough per-grid-step VMEM footprint estimate (bytes)."""
    io = 2 * bt * T * C * (in_itemsize + out_itemsize)       # double-buffered x/out tiles
    wts = 3 * C * C * 2 * 2                                   # resident bf16 weights (x2 bufs)
    act = bt * T * C * (2 + 3 * 2 + 4)                        # xb + q/k/v bf16 + o f32
    scores = bt * H * T * T * (4 + 4 + 2)                     # s, e (f32) + p (bf16)
    return int((io + wts + act + scores) * 1.5)               # relayout / scratch headroom


def _choose_batch_tile(B, T, C, H, in_itemsize, out_itemsize, budget):
    best = 1
    for bt in range(1, B + 1):
        if B % bt:
            continue
        if B >= 2 and B // bt < 2:
            # keep >= 2 grid steps so "parallel" can shard both v7x TensorCores
            continue
        if _step_vmem_bytes(bt, T, C, H, in_itemsize, out_itemsize) > budget:
            break
        best = bt
        if bt * T >= 256:            # enough MXU M-fill; stop growing the tile
            break
    return best


def multi_head_attention(x, wq, wk, wv, *, masked=False, batch_tile=None):
    """x: (B, T, C); wq/wk/wv: (H, hd, hd) (nn.Linear weights). Returns (B, T, C)."""
    B, T, C = x.shape
    H, hd, _ = wq.shape
    assert C == H * hd

    scale = float(hd) ** -0.5
    wq_bd = _block_diag_transposed(wq, scale)   # scale folded into the Q projection
    wk_bd = _block_diag_transposed(wk)
    wv_bd = _block_diag_transposed(wv)

    out_dtype = x.dtype
    in_isz = x.dtype.itemsize
    out_isz = jnp.dtype(out_dtype).itemsize

    vmem_cap = _vmem_capacity_bytes()
    if batch_tile is None:
        batch_tile = _choose_batch_tile(B, T, C, H, in_isz, out_isz,
                                        budget=int(vmem_cap * 0.6))
    assert B % batch_tile == 0
    grid = (B // batch_tile,)

    kernel = functools.partial(_mha_kernel, n_heads=H, head_dim=hd, masked=masked)

    # Advisory cost estimate: fused (block-diag) projections + attention matmuls.
    flops = 3 * 2 * B * T * C * C + 2 * 2 * B * H * T * T * hd
    transcendentals = B * H * T * T                       # exp in the softmax
    bytes_accessed = (B * T * C * in_isz + B * T * C * out_isz + 3 * C * C * 2)

    return pl.pallas_call(
        kernel,
        out_shape=jax.ShapeDtypeStruct((B, T, C), out_dtype),
        grid_spec=pltpu.PrefetchScalarGridSpec(
            num_scalar_prefetch=0,
            grid=grid,
            in_specs=[
                # native (B, T, C) batch tile
                pl.BlockSpec((batch_tile, T, C), lambda b: (b, 0, 0)),
                # weights: constant index_map -> DMA'd once, stay VMEM-resident
                pl.BlockSpec((C, C), lambda b: (0, 0)),
                pl.BlockSpec((C, C), lambda b: (0, 0)),
                pl.BlockSpec((C, C), lambda b: (0, 0)),
            ],
            out_specs=pl.BlockSpec((batch_tile, T, C), lambda b: (b, 0, 0)),
        ),
        compiler_params=pltpu.CompilerParams(
            dimension_semantics=("parallel",),
            vmem_limit_bytes=min(int(vmem_cap * 0.75), 96 * 1024 * 1024),
        ),
        cost_estimate=pl.CostEstimate(
            flops=flops,
            transcendentals=transcendentals,
            bytes_accessed=bytes_accessed),
    )(x, wq_bd, wk_bd, wv_bd)


def _reference(x, wq, wk, wv, *, masked=False):
    """Pure-JAX (f32) replica of the PyTorch forward for validation."""
    B, T, C = x.shape
    H, hd, _ = wq.shape
    outs = []
    for h in range(H):
        xs = x[:, :, h * hd:(h + 1) * hd]
        q = xs @ wq[h].T
        k = xs @ wk[h].T
        v = xs @ wv[h].T
        w = q @ jnp.swapaxes(k, -2, -1) * hd ** (-0.5)
        if masked:
            tril = jnp.tril(jnp.ones((T, T)))
            w = jnp.where(tril == 0, -jnp.inf, w)
        w = jax.nn.softmax(w, axis=2)
        outs.append(w @ v)
    return jnp.concatenate(outs, axis=2)


if __name__ == "__main__":
    heads = 16          # per-head feature size (the `heads` arg of the module)
    no_of_heads = 4     # number of Attention modules
    C = heads * no_of_heads

    key = jax.random.PRNGKey(0)
    kx, kq, kk, kv = jax.random.split(key, 4)

    # nn.Linear default init: U(-1/sqrt(in_features), 1/sqrt(in_features))
    bound = 1.0 / (heads ** 0.5)
    wq = jax.random.uniform(kq, (no_of_heads, heads, heads), jnp.float32, -bound, bound)
    wk = jax.random.uniform(kk, (no_of_heads, heads, heads), jnp.float32, -bound, bound)
    wv = jax.random.uniform(kv, (no_of_heads, heads, heads), jnp.float32, -bound, bound)

    # small shape matching the module (masked=None in the module -> no causal mask)
    B, T = 2, 8
    x = jax.random.normal(kx, (B, T, C), dtype=jnp.float32)

    out = jax.block_until_ready(multi_head_attention(x, wq, wk, wv, masked=False))
    ref = _reference(x, wq, wk, wv, masked=False)
    assert out.shape == (B, T, C)
    # tolerance relaxed vs f32 reference because MXU operands are bf16
    assert jnp.allclose(out, ref, atol=7e-2, rtol=7e-2), float(jnp.max(jnp.abs(out - ref)))

    # causal (masked=True) path
    out_m = jax.block_until_ready(multi_head_attention(x, wq, wk, wv, masked=True))
    ref_m = _reference(x, wq, wk, wv, masked=True)
    assert jnp.allclose(out_m, ref_m, atol=7e-2, rtol=7e-2), float(jnp.max(jnp.abs(out_m - ref_m)))

    # larger shape exercising batch_tile > 1 (bigger MXU M-fill, multi-step grid)
    B2, T2 = 8, 128
    x2 = jax.random.normal(kx, (B2, T2, C), dtype=jnp.float32)
    out2 = jax.block_until_ready(multi_head_attention(x2, wq, wk, wv, masked=True))
    ref2 = _reference(x2, wq, wk, wv, masked=True)
    assert out2.shape == (B2, T2, C)
    assert jnp.allclose(out2, ref2, atol=1e-1, rtol=1e-1), float(jnp.max(jnp.abs(out2 - ref2)))

    print("KERNEL_OK")
</pallas_src>

<mosaic_0001>
module attributes {stable_mosaic.version = 11 : i64} {
  func.func @_mha_kernel(%arg0: i32, %arg1: memref<1x8x64xf32, #tpu.memory_space<vmem>>, %arg2: memref<64x64xbf16, #tpu.memory_space<vmem>>, %arg3: memref<64x64xbf16, #tpu.memory_space<vmem>>, %arg4: memref<64x64xbf16, #tpu.memory_space<vmem>>, %arg5: memref<1x8x64xf32, #tpu.memory_space<vmem>>) attributes {dimension_semantics = [#tpu.dimension_semantics<parallel>], iteration_bounds = array<i64: 2>, scalar_prefetch = 0 : i64, scratch_operands = 0 : i64, tpu.core_type = #tpu.core_type<tc>, window_params = [{transform_indices = @transform_0, window_bounds = array<i64: 1, 8, 64>}, {pipeline_mode = #tpu.pipeline_mode<synchronous>, transform_indices = @transform_1, window_bounds = array<i64: 64, 64>}, {pipeline_mode = #tpu.pipeline_mode<synchronous>, transform_indices = @transform_2, window_bounds = array<i64: 64, 64>}, {pipeline_mode = #tpu.pipeline_mode<synchronous>, transform_indices = @transform_3, window_bounds = array<i64: 64, 64>}, {transform_indices = @transform_4, window_bounds = array<i64: 1, 8, 64>}]} {
    %c0 = arith.constant 0 : index
    %c0_0 = arith.constant 0 : index
    %c0_1 = arith.constant 0 : index
    %0 = vector.load %arg1[%c0, %c0_0, %c0_1] : memref<1x8x64xf32, #tpu.memory_space<vmem>>, vector<1x8x64xf32>
    %1 = vector.shape_cast %0 : vector<1x8x64xf32> to vector<8x64xf32>
    %2 = arith.truncf %1 : vector<8x64xf32> to vector<8x64xbf16>
    %c0_2 = arith.constant 0 : index
    %c0_3 = arith.constant 0 : index
    %3 = vector.load %arg2[%c0_2, %c0_3] : memref<64x64xbf16, #tpu.memory_space<vmem>>, vector<64x64xbf16>
    %cst = arith.constant dense<0.000000e+00> : vector<8x64xf32>
    %4 = tpu.matmul %2, %3, %cst {dimension_numbers = #tpu.dot_dimension_numbers<[1], [0], [0], [1], [0, 0, 1, 1], [], []>} : vector<8x64xbf16>, vector<64x64xbf16>, vector<8x64xf32> -> vector<8x64xf32>
    %5 = arith.truncf %4 : vector<8x64xf32> to vector<8x64xbf16>
    %c0_4 = arith.constant 0 : index
    %c0_5 = arith.constant 0 : index
    %6 = vector.load %arg3[%c0_4, %c0_5] : memref<64x64xbf16, #tpu.memory_space<vmem>>, vector<64x64xbf16>
    %cst_6 = arith.constant dense<0.000000e+00> : vector<8x64xf32>
    %7 = tpu.matmul %2, %6, %cst_6 {dimension_numbers = #tpu.dot_dimension_numbers<[1], [0], [0], [1], [0, 0, 1, 1], [], []>} : vector<8x64xbf16>, vector<64x64xbf16>, vector<8x64xf32> -> vector<8x64xf32>
    %8 = arith.truncf %7 : vector<8x64xf32> to vector<8x64xbf16>
    %c0_7 = arith.constant 0 : index
    %c0_8 = arith.constant 0 : index
    %9 = vector.load %arg4[%c0_7, %c0_8] : memref<64x64xbf16, #tpu.memory_space<vmem>>, vector<64x64xbf16>
    %cst_9 = arith.constant dense<0.000000e+00> : vector<8x64xf32>
    %10 = tpu.matmul %2, %9, %cst_9 {dimension_numbers = #tpu.dot_dimension_numbers<[1], [0], [0], [1], [0, 0, 1, 1], [], []>} : vector<8x64xbf16>, vector<64x64xbf16>, vector<8x64xf32> -> vector<8x64xf32>
    %11 = arith.truncf %10 : vector<8x64xf32> to vector<8x64xbf16>
    %12 = vector.shape_cast %5 : vector<8x64xbf16> to vector<1x8x4x16xbf16>
    %13 = tpu.transpose %12, [0, 2, 1, 3] : vector<1x8x4x16xbf16> -> vector<1x4x8x16xbf16>
    %14 = vector.shape_cast %13 : vector<1x4x8x16xbf16> to vector<4x8x16xbf16>
    %15 = vector.shape_cast %8 : vector<8x64xbf16> to vector<1x8x4x16xbf16>
    %16 = tpu.transpose %15, [0, 2, 1, 3] : vector<1x8x4x16xbf16> -> vector<1x4x8x16xbf16>
    %17 = vector.shape_cast %16 : vector<1x4x8x16xbf16> to vector<4x8x16xbf16>
    %18 = vector.shape_cast %11 : vector<8x64xbf16> to vector<1x8x4x16xbf16>
    %19 = tpu.transpose %18, [0, 2, 1, 3] : vector<1x8x4x16xbf16> -> vector<1x4x8x16xbf16>
    %20 = vector.shape_cast %19 : vector<1x4x8x16xbf16> to vector<4x8x16xbf16>
    %cst_10 = arith.constant dense<0.000000e+00> : vector<4x8x8xf32>
    %21 = tpu.matmul %14, %17, %cst_10 {dimension_numbers = #tpu.dot_dimension_numbers<[2], [2], [1], [1], [0, 0, 0, 1, 1, 1], [0], [0]>} : vector<4x8x16xbf16>, vector<4x8x16xbf16>, vector<4x8x8xf32> -> vector<4x8x8xf32>
    %cst_11 = arith.constant dense<0xFF800000> : vector<4x8xf32>
    %22 = vector.multi_reduction <maximumf>, %21, %cst_11 [2] : vector<4x8x8xf32> to vector<4x8xf32>
    %23 = vector.shape_cast %22 : vector<4x8xf32> to vector<4x8x1xf32>
    %24 = vector.broadcast %23 : vector<4x8x1xf32> to vector<4x8x8xf32>
    %25 = arith.subf %21, %24 : vector<4x8x8xf32>
    %26 = math.exp %25 : vector<4x8x8xf32>
    %cst_12 = arith.constant dense<0.000000e+00> : vector<4x8xf32>
    %27 = vector.multi_reduction <add>, %26, %cst_12 [2] : vector<4x8x8xf32> to vector<4x8xf32>
    %28 = vector.shape_cast %27 : vector<4x8xf32> to vector<4x8x1xf32>
    %29 = tpu.reciprocal %28 {approx = true} : vector<4x8x1xf32> -> vector<4x8x1xf32>
    %30 = vector.broadcast %29 : vector<4x8x1xf32> to vector<4x8x8xf32>
    %31 = arith.mulf %26, %30 : vector<4x8x8xf32>
    %32 = arith.truncf %31 : vector<4x8x8xf32> to vector<4x8x8xbf16>
    %cst_13 = arith.constant dense<0.000000e+00> : vector<4x8x16xf32>
    %33 = tpu.matmul %32, %20, %cst_13 {dimension_numbers = #tpu.dot_dimension_numbers<[2], [1], [1], [2], [0, 0, 0, 1, 1, 2], [0], [0]>} : vector<4x8x8xbf16>, vector<4x8x16xbf16>, vector<4x8x16xf32> -> vector<4x8x16xf32>
    %34 = vector.shape_cast %33 : vector<4x8x16xf32> to vector<1x4x8x16xf32>
    %35 = tpu.transpose %34, [0, 2, 1, 3] : vector<1x4x8x16xf32> -> vector<1x8x4x16xf32>
    %36 = vector.shape_cast %35 : vector<1x8x4x16xf32> to vector<1x8x64xf32>
    %c0_14 = arith.constant 0 : index
    %c0_15 = arith.constant 0 : index
    %c0_16 = arith.constant 0 : index
    %37 = vector.load %arg5[%c0_14, %c0_15, %c0_16] : memref<1x8x64xf32, #tpu.memory_space<vmem>>, vector<1x8x64xf32>
    tpu.vector_store %arg5[%c0_14, %c0_15, %c0_16], %36 {strides = array<i32>} : memref<1x8x64xf32, #tpu.memory_space<vmem>>, vector<1x8x64xf32>,
    return
  }
  func.func @transform_0(%arg0: i32) -> (i32, i32, i32) {
    %c0_i32 = arith.constant 0 : i32
    %c0_i32_0 = arith.constant 0 : i32
    %c0_i32_1 = arith.constant 0 : i32
    return %arg0, %c0_i32, %c0_i32_0 : i32, i32, i32
  }
  func.func @transform_1(%arg0: i32) -> (i32, i32) {
    %c0_i32 = arith.constant 0 : i32
    %c0_i32_0 = arith.constant 0 : i32
    %c0_i32_1 = arith.constant 0 : i32
    return %c0_i32, %c0_i32_0 : i32, i32
  }
  func.func @transform_2(%arg0: i32) -> (i32, i32) {
    %c0_i32 = arith.constant 0 : i32
    %c0_i32_0 = arith.constant 0 : i32
    %c0_i32_1 = arith.constant 0 : i32
    return %c0_i32, %c0_i32_0 : i32, i32
  }
  func.func @transform_3(%arg0: i32) -> (i32, i32) {
    %c0_i32 = arith.constant 0 : i32
    %c0_i32_0 = arith.constant 0 : i32
    %c0_i32_1 = arith.constant 0 : i32
    return %c0_i32, %c0_i32_0 : i32, i32
  }
  func.func @transform_4(%arg0: i32) -> (i32, i32, i32) {
    %c0_i32 = arith.constant 0 : i32
    %c0_i32_0 = arith.constant 0 : i32
    %c0_i32_1 = arith.constant 0 : i32
    return %arg0, %c0_i32, %c0_i32_0 : i32, i32, i32
  }
}

</mosaic_0001>

<llo_original>
// kernel: tpu_custom_call.1
$region0: #{tpu_custom_call.1}
  #allocation0 [shape = 'u32[]', space=smem, size = 0x4, offset = 0x4, fixed_abs, tag = 'smem constant byte address 0x4 - core index']
  #allocation1 [shape = 'u32[144,128]{1,0:T(1,128)}', space=vmem, size = 0x12000, scoped, tag = 'internal scratch']
  %s0 = inlined_call_operand.hbm [shape: f32[2,8,64], index: 0, kind: input, shape index: {}]
  %s1 = inlined_call_operand.hbm [shape: bf16[64,64], index: 1, kind: input, shape index: {}]
  %s2 = inlined_call_operand.hbm [shape: bf16[64,64], index: 2, kind: input, shape index: {}]
  %s3 = inlined_call_operand.hbm [shape: bf16[64,64], index: 3, kind: input, shape index: {}]
  %s4 = inlined_call_operand.hbm [shape: f32[2,8,64], index: 4, kind: output, shape index: {}]
  %s5 = sld [smem:[#allocation0]]
  $region65: #{tpu_custom_call.1} parent=0
    _
  %s7 = ssub.s32 1, %s5
  %s8 = scalar_select 0, %s7, %s5
  $region1: #{tpu_custom_call.1} parent=0
    #allocation2 [shape = 'u8[8192]{0}', space=vmem, size = 0x2000, scoped, tag = 'input window, operand 0']
    #allocation3 [shape = 's32[2]{0}', space=sflag, size = 0x8, scoped, tag = 'scoped memory for tpu_custom_call.1']
    #allocation4 [shape = 's32[2]{0}', space=sflag, size = 0x8, scoped, tag = 'scoped memory for tpu_custom_call.1']
    #allocation5 [shape = 'u8[16384]{0}', space=vmem, size = 0x4000, scoped, tag = 'input window, operand 1, single buffered']
    #allocation6 [shape = 's32[1]{0}', space=sflag, size = 0x4, scoped, tag = 'scoped memory for tpu_custom_call.1']
    #allocation7 [shape = 'u8[16384]{0}', space=vmem, size = 0x4000, scoped, tag = 'input window, operand 2, single buffered']
    #allocation8 [shape = 'u8[16384]{0}', space=vmem, size = 0x4000, scoped, tag = 'input window, operand 3, single buffered']
    #allocation9 [shape = 's32[1]{0}', space=sflag, size = 0x4, scoped, tag = 'scoped memory for tpu_custom_call.1']
    #allocation10 [shape = 'u8[8192]{0}', space=vmem, size = 0x2000, scoped, tag = 'output window, operand 0']
    %9 = vsyncpa [#allocation3], 0
    %s10 = scalar_lea.sflag [#allocation3], 1
    %11 = vsyncpa %s10, 0
    %12 = vsyncpa [#allocation6], 0
    %13 = vsyncpa [#allocation9], 0
    %14 = vsyncpa [#allocation4], 0
    %s15 = scalar_lea.sflag [#allocation4], 1
    %16 = vsyncpa %s15, 0
    loop: start=0, step=1, limit=4
    $region2: #{tpu_custom_call.1} parent=1 // loop_pre_header
      _
    $region3: #{tpu_custom_call.1} parent=1 // loop_header
      %s18 = sphi 0, %s22
      %p19 = scmp.ge.s32.totalorder %s18, 4
      %s28 = sphi 0, %s30
      %s31 = sphi 0, %s28
      %s32 = sphi 0, %s31
      %s48 = sphi 0, %s32
      %s52 = sphi 0, %s52
      %s54 = sphi 0, %s52
      %s55 = sphi 0, %s54
      %s69 = sphi 0, %s55
      %s73 = sphi 0, %s73
      %s75 = sphi 0, %s73
      %s76 = sphi 0, %s75
      %s90 = sphi 0, %s76
      %s94 = sphi 0, %s94
      %s96 = sphi 0, %s94
      %s97 = sphi 0, %s96
      %s111 = sphi 0, %s97
      %s117 = sphi 0, %s119
      %s120 = sphi 0, %s117
      %s121 = sphi 0, %s120
      %s137 = sphi 0, %s121
    $region4: #{tpu_custom_call.1} parent=1 // loop_header_branch
      %21 = sbr.rel (%p19) target = $region8
    $region5: #{tpu_custom_call.1} parent=1 // loop_body
      %s23 = ssub.s32 %s18, 1
      %s24 = ssub.s32 %s18, 2
      %s25 = sadd.s32 %s18, 1
      %s26 = ssub.s32 %s18, %s25
      %p27 = scmp.eq.s32.totalorder %s26, 0
      %s29 = sadd.s32 %s28, 1
      %s30 = scalar_select %p27, %s28, %s29
      %p33 = pneg %p27
      %p34 = scmp.eq.s32.totalorder %s18, 1
      %p35 = por %p33, %p34
      %p36 = scmp.ne.s32.totalorder %s28, %s31
      %p37 = scmp.eq.s32.totalorder %s18, 0
      %p38 = por %p36, %p37
      %p39 = scmp.ne.s32.totalorder %s28, %s31
      %p40 = scmp.eq.s32.totalorder %s23, 1
      %p41 = por %p39, %p40
      %p42 = scmp.ne.s32.totalorder %s31, %s32
      %p43 = scmp.eq.s32.totalorder %s23, 0
      %p44 = por %p42, %p43
      %p45 = scmp.ne.s32.totalorder %s31, %s32
      %p46 = scmp.eq.s32.totalorder %s24, 1
      %p47 = por %p45, %p46
      %p49 = scmp.ne.s32.totalorder %s32, %s48
      %p50 = scmp.eq.s32.totalorder %s24, 0
      %p51 = por %p49, %p50
      %s53 = sadd.s32 %s52, 1
      %p56 = scmp.eq.s32.totalorder %s18, 1
      %p57 = scmp.ne.s32.totalorder %s52, %s54
      %p58 = scmp.eq.s32.totalorder %s18, 0
      %p59 = por %p57, %p58
      %p60 = scmp.ne.s32.totalorder %s52, %s54
      %p61 = scmp.eq.s32.totalorder %s23, 1
      %p62 = por %p60, %p61
      %p63 = scmp.ne.s32.totalorder %s54, %s55
      %p64 = scmp.eq.s32.totalorder %s23, 0
      %p65 = por %p63, %p64
      %p66 = scmp.ne.s32.totalorder %s54, %s55
      %p67 = scmp.eq.s32.totalorder %s24, 1
      %p68 = por %p66, %p67
      %p70 = scmp.ne.s32.totalorder %s55, %s69
      %p71 = scmp.eq.s32.totalorder %s24, 0
      %p72 = por %p70, %p71
      %s74 = sadd.s32 %s73, 1
      %p77 = scmp.eq.s32.totalorder %s18, 1
      %p78 = scmp.ne.s32.totalorder %s73, %s75
      %p79 = scmp.eq.s32.totalorder %s18, 0
      %p80 = por %p78, %p79
      %p81 = scmp.ne.s32.totalorder %s73, %s75
      %p82 = scmp.eq.s32.totalorder %s23, 1
      %p83 = por %p81, %p82
      %p84 = scmp.ne.s32.totalorder %s75, %s76
      %p85 = scmp.eq.s32.totalorder %s23, 0
      %p86 = por %p84, %p85
      %p87 = scmp.ne.s32.totalorder %s75, %s76
      %p88 = scmp.eq.s32.totalorder %s24, 1
      %p89 = por %p87, %p88
      %p91 = scmp.ne.s32.totalorder %s76, %s90
      %p92 = scmp.eq.s32.totalorder %s24, 0
      %p93 = por %p91, %p92
      %s95 = sadd.s32 %s94, 1
      %p98 = scmp.eq.s32.totalorder %s18, 1
      %p99 = scmp.ne.s32.totalorder %s94, %s96
      %p100 = scmp.eq.s32.totalorder %s18, 0
      %p101 = por %p99, %p100
      %p102 = scmp.ne.s32.totalorder %s94, %s96
      %p103 = scmp.eq.s32.totalorder %s23, 1
      %p104 = por %p102, %p103
      %p105 = scmp.ne.s32.totalorder %s96, %s97
      %p106 = scmp.eq.s32.totalorder %s23, 0
      %p107 = por %p105, %p106
      %p108 = scmp.ne.s32.totalorder %s96, %s97
      %p109 = scmp.eq.s32.totalorder %s24, 1
      %p110 = por %p108, %p109
      %p112 = scmp.ne.s32.totalorder %s97, %s111
      %p113 = scmp.eq.s32.totalorder %s24, 0
      %p114 = por %p112, %p113
      %s115 = ssub.s32 %s18, %s25
      %p116 = scmp.eq.s32.totalorder %s115, 0
      %s118 = sadd.s32 %s117, 1
      %s119 = scalar_select %p116, %s117, %s118
      %p122 = pneg %p116
      %p123 = scmp.eq.s32.totalorder %s18, 1
      %p124 = por %p122, %p123
      %p125 = scmp.ne.s32.totalorder %s117, %s120
      %p126 = scmp.eq.s32.totalorder %s18, 0
      %p127 = por %p125, %p126
      %p128 = scmp.ne.s32.totalorder %s117, %s120
      %p129 = scmp.eq.s32.totalorder %s23, 1
      %p130 = por %p128, %p129
      %p131 = scmp.ne.s32.totalorder %s120, %s121
      %p132 = scmp.eq.s32.totalorder %s23, 0
      %p133 = por %p131, %p132
      %p134 = scmp.ne.s32.totalorder %s120, %s121
      %p135 = scmp.eq.s32.totalorder %s24, 1
      %p136 = por %p134, %p135
      %p138 = scmp.ne.s32.totalorder %s121, %s137
      %p139 = scmp.eq.s32.totalorder %s24, 0
      %p140 = por %p138, %p139
      %p141 = scmp.le.s32.totalorder 1, %s18
      %p142 = scmp.lt.s32.totalorder %s18, 3
      %p143 = pnand %p141, %p142
      %p144 = pneg %p143
      // Predicated region
      $region9: #{tpu_custom_call.1} parent=5 // pred_check
        _
      $region10: #{tpu_custom_call.1} parent=5 // pred_check_branch
        %146 = sbr.rel (%p143) target = $region12
      $region11: #{tpu_custom_call.1} parent=5 // pred_region
        %s147 = ssub.s32 %s18, 1
        // Predicated region
        $region13: #{tpu_custom_call.1} parent=11 // pred_check
          %p148 = pneg %p65
        $region14: #{tpu_custom_call.1} parent=11 // pred_check_branch
          %150 = sbr.rel (%p148) target = $region16
        $region15: #{tpu_custom_call.1} parent=11 // pred_region
          %s152 = ssub.s32 512, 512
          %153 = vsyncadd [#allocation6], %s152
          %s154 = sshll.u32 [#allocation5], 4
          %s155 = int_to_ptr.vmem [resolvable:$true] %s154
          %160 = dma.hbm_to_vmem [thread:$0]  %s1, 512, %s155, [#allocation6], 64, 64, 4
        $region16: #{tpu_custom_call.1} parent=11 // pred_fallthru
          _
        // Predicated region
        $region17: #{tpu_custom_call.1} parent=11 // pred_check
          %p161 = pneg %p86
        $region18: #{tpu_custom_call.1} parent=11 // pred_check_branch
          %163 = sbr.rel (%p161) target = $region20
        $region19: #{tpu_custom_call.1} parent=11 // pred_region
          %s165 = ssub.s32 512, 512
          %166 = vsyncadd [#allocation6], %s165
          %s167 = sshll.u32 [#allocation7], 4
          %s168 = int_to_ptr.vmem [resolvable:$true] %s167
          %173 = dma.hbm_to_vmem [thread:$0]  %s2, 512, %s168, [#allocation6], 64, 64, 4
        $region20: #{tpu_custom_call.1} parent=11 // pred_fallthru
          _
        // Predicated region
        $region21: #{tpu_custom_call.1} parent=11 // pred_check
          %p174 = pneg %p107
        $region22: #{tpu_custom_call.1} parent=11 // pred_check_branch
          %176 = sbr.rel (%p174) target = $region24
        $region23: #{tpu_custom_call.1} parent=11 // pred_region
          %s178 = ssub.s32 512, 512
          %179 = vsyncadd [#allocation9], %s178
          %s180 = sshll.u32 [#allocation8], 4
          %s181 = int_to_ptr.vmem [resolvable:$true] %s180
          %186 = dma.hbm_to_vmem [thread:$0]  %s3, 512, %s181, [#allocation9], 64, 64, 4
        $region24: #{tpu_custom_call.1} parent=11 // pred_fallthru
          _
      $region12: #{tpu_custom_call.1} parent=5 // pred_fallthru
        _
      %p187 = scmp.lt.s32.totalorder %s18, 2
      // Predicated region
      $region25: #{tpu_custom_call.1} parent=5 // pred_check
        %p188 = pneg %p187
      $region26: #{tpu_custom_call.1} parent=5 // pred_check_branch
        %190 = sbr.rel (%p188) target = $region28
      $region27: #{tpu_custom_call.1} parent=5 // pred_region
        // Predicated region
        $region29: #{tpu_custom_call.1} parent=27 // pred_check
          %p191 = pneg %p38
        $region30: #{tpu_custom_call.1} parent=27 // pred_check_branch
          %193 = sbr.rel (%p191) target = $region32
        $region31: #{tpu_custom_call.1} parent=27 // pred_region
          %s194 = sand.u32 %s28, 1
          %s195 = scalar_lea.sflag [#allocation3], %s194
          %s196 = sand.u32 %s28, 1
          %s197 = smul.addr %s196, 8
          %s198 = scalar_lea.vmem [#allocation2], %s197
          %s200 = ssub.s32 128, 128
          %201 = vsyncadd %s195, %s200
          %s202 = smul.addr %s18, 128
          %s203 = scalar_lea.hbm %s0, %s202
          %s205 = sshll.u32 %s198, 4
          %s206 = int_to_ptr.vmem [resolvable:$true] %s205
          %208 = dma.hbm_to_vmem [thread:$0]  %s203, 128, %s206, %s195
        $region32: #{tpu_custom_call.1} parent=27 // pred_fallthru
          _
      $region28: #{tpu_custom_call.1} parent=5 // pred_fallthru
        _
      %p209 = scmp.le.s32.totalorder 1, %s18
      %p210 = scmp.lt.s32.totalorder %s18, 3
      %p211 = pnand %p209, %p210
      %p212 = pneg %p211
      // Predicated region
      $region33: #{tpu_custom_call.1} parent=5 // pred_check
        _
      $region34: #{tpu_custom_call.1} parent=5 // pred_check_branch
        %214 = sbr.rel (%p211) target = $region36
      $region35: #{tpu_custom_call.1} parent=5 // pred_region
        %s215 = ssub.s32 %s18, 1
        %s216 = sand.u32 %s31, 1
        %s217 = scalar_lea.sflag [#allocation3], %s216
        %s218 = sand.u32 %s31, 1
        %s219 = smul.addr %s218, 8
        %s220 = scalar_lea.vmem [#allocation2], %s219
        // Predicated region
        $region37: #{tpu_custom_call.1} parent=35 // pred_check
          %p221 = pneg %p44
        $region38: #{tpu_custom_call.1} parent=35 // pred_check_branch
          %223 = sbr.rel (%p221) target = $region40
        $region39: #{tpu_custom_call.1} parent=35 // pred_region
          %224 = dma.done %s217, 128
        $region40: #{tpu_custom_call.1} parent=35 // pred_fallthru
          _
        // Predicated region
        $region41: #{tpu_custom_call.1} parent=35 // pred_check
          %p225 = pneg %p65
        $region42: #{tpu_custom_call.1} parent=35 // pred_check_branch
          %227 = sbr.rel (%p225) target = $region44
        $region43: #{tpu_custom_call.1} parent=35 // pred_region
          %228 = dma.done [#allocation6], 512
        $region44: #{tpu_custom_call.1} parent=35 // pred_fallthru
          _
        // Predicated region
        $region45: #{tpu_custom_call.1} parent=35 // pred_check
          %p229 = pneg %p86
        $region46: #{tpu_custom_call.1} parent=35 // pred_check_branch
          %231 = sbr.rel (%p229) target = $region48
        $region47: #{tpu_custom_call.1} parent=35 // pred_region
          %232 = dma.done [#allocation6], 512
        $region48: #{tpu_custom_call.1} parent=35 // pred_fallthru
          _
        // Predicated region
        $region49: #{tpu_custom_call.1} parent=35 // pred_check
          %p233 = pneg %p107
        $region50: #{tpu_custom_call.1} parent=35 // pred_check_branch
          %235 = sbr.rel (%p233) target = $region52
        $region51: #{tpu_custom_call.1} parent=35 // pred_region
          %236 = dma.done [#allocation9], 512
        $region52: #{tpu_custom_call.1} parent=35 // pred_fallthru
          _
        %s237 = sand.u32 %s31, 1
        %s238 = scalar_lea.sflag [#allocation3], %s237
        %s239 = sand.u32 %s31, 1
        %s240 = smul.addr %s239, 8
        %s241 = scalar_lea.vmem [#allocation2], %s240
        %p242 = pneg %p44
        %p243 = pneg %p41
        %p244 = pneg %p65
        %p245 = pneg %p62
        %p246 = pneg %p86
        %p247 = pneg %p83
        %p248 = pneg %p107
        %p249 = pneg %p104
        %p250 = pneg %p133
        %p251 = pneg %p130
        %s252 = sand.u32 %s120, 1
        %s253 = scalar_lea.sflag [#allocation4], %s252
        %s254 = sand.u32 %s120, 1
        %s255 = smul.addr %s254, 8
        %s256 = scalar_lea.vmem [#allocation10], %s255
        %v258 = vld [vmem:[%s220] sm:$0xff]
        %v259 = vpack.c.bf16 %v258, %v258
        %v260 = vld [vmem:[#allocation5] sm:$0xf]
        %v261 = vld [vmem:[#allocation5 + $0x4] sm:$0xf]
        %v262 = vld [vmem:[#allocation5 + $0x8] sm:$0xf]
        %v263 = vld [vmem:[#allocation5 + $0xc] sm:$0xf]
        %v264 = vld [vmem:[#allocation5 + $0x10] sm:$0xf]
        %v265 = vld [vmem:[#allocation5 + $0x14] sm:$0xf]
        %v266 = vld [vmem:[#allocation5 + $0x18] sm:$0xf]
        %v267 = vld [vmem:[#allocation5 + $0x1c] sm:$0xf]
        %v276 = vunpack.c.l.b16 %v260
        %v277 = vunpack.c.l.b16 %v261
        %v278 = vunpack.c.l.b16 %v262
        %v279 = vunpack.c.l.b16 %v263
        %v280 = vunpack.c.l.b16 %v264
        %v281 = vunpack.c.l.b16 %v265
        %v282 = vunpack.c.l.b16 %v266
        %v283 = vunpack.c.l.b16 %v267
        %v284 = vpack.c.b16 %v277, %v276
        %v285 = vpack.c.b16 %v279, %v278
        %v286 = vpack.c.b16 %v281, %v280
        %v287 = vpack.c.b16 %v283, %v282
        %vm292 = vcmask 523264
        %v294 = vsel %vm292, %v259, 0
        %296 = vmatprep.subr.bf16.mxu0 0
        %297 = vmatpush1.bf16.msra.mxu0 0
        %298 = vmatprep.subr.bf16.mxu0 0
        %299 = vmatpush1.bf16.msra.mxu0 0
        %300 = vmatprep.subr.bf16.mxu0 0
        %301 = vmatpush1.bf16.msra.mxu0 0
        %302 = vmatprep.subr.bf16.mxu0 0
        %303 = vmatpush1.bf16.msra.mxu0 0
        %304 = vmatprep.subr.bf16.mxu0 0
        %305 = vmatpush1.bf16.msra.mxu0 %v287
        %306 = vmatprep.subr.bf16.mxu0 0
        %307 = vmatpush1.bf16.msra.mxu0 %v286
        %308 = vmatprep.subr.bf16.mxu0 0
        %309 = vmatpush1.bf16.msra.mxu0 %v285
        %310 = vmatprep.subr.bf16.mxu0 0
        %311 = vmatpush1.bf16.msra.mxu0 %v284
        %312 = vmatprep.subr.bf16.mxu0 0
        %313 = vmatpush2.bf16.msra.mxu0 0
        %314 = vmatprep.subr.bf16.mxu0 0
        %315 = vmatpush2.bf16.msra.mxu0 0
        %316 = vmatprep.subr.bf16.mxu0 0
        %317 = vmatpush2.bf16.msra.mxu0 0
        %318 = vmatprep.subr.bf16.mxu0 0
        %319 = vmatpush2.bf16.msra.mxu0 0
        %320 = vmatprep.subr.bf16.mxu0 0
        %321 = vmatpush2.bf16.msra.mxu0 0
        %322 = vmatprep.subr.bf16.mxu0 0
        %323 = vmatpush2.bf16.msra.mxu0 0
        %324 = vmatprep.subr.bf16.mxu0 0
        %325 = vmatpush2.bf16.msra.mxu0 0
        %326 = vmatprep.subr.bf16.mxu0 0
        %327 = vmatpush2.bf16.msra.mxu0 0
        %328 = vmatprep.mubr.bf16.mxu0 0
        %329 = vmatmul.mubr.bf16.gmra.mxu0 %v294
        %v330 = vpop.f32.mrf.mxu0
        %v331 = vadd.f32 0.0, %v330
        %v332 = vpop.f32.mrf.mxu0
        %v333 = vpop.f32.mrf.mxu0
        %v334 = vpop.f32.mrf.mxu0
        %335 = vdwg.mxu0
        %v336 = vpack.c.bf16 %v331, %v331
        %v337 = vld [vmem:[#allocation7] sm:$0xf]
        %v338 = vld [vmem:[#allocation7 + $0x4] sm:$0xf]
        %v339 = vld [vmem:[#allocation7 + $0x8] sm:$0xf]
        %v340 = vld [vmem:[#allocation7 + $0xc] sm:$0xf]
        %v341 = vld [vmem:[#allocation7 + $0x10] sm:$0xf]
        %v342 = vld [vmem:[#allocation7 + $0x14] sm:$0xf]
        %v343 = vld [vmem:[#allocation7 + $0x18] sm:$0xf]
        %v344 = vld [vmem:[#allocation7 + $0x1c] sm:$0xf]
        %v353 = vunpack.c.l.b16 %v337
        %v354 = vunpack.c.l.b16 %v338
        %v355 = vunpack.c.l.b16 %v339
        %v356 = vunpack.c.l.b16 %v340
        %v357 = vunpack.c.l.b16 %v341
        %v358 = vunpack.c.l.b16 %v342
        %v359 = vunpack.c.l.b16 %v343
        %v360 = vunpack.c.l.b16 %v344
        %v361 = vpack.c.b16 %v354, %v353
        %v362 = vpack.c.b16 %v356, %v355
        %v363 = vpack.c.b16 %v358, %v357
        %v364 = vpack.c.b16 %v360, %v359
        %369 = vmatprep.subr.bf16.mxu0 0
        %370 = vmatpush1.bf16.msra.mxu0 0
        %371 = vmatprep.subr.bf16.mxu0 0
        %372 = vmatpush1.bf16.msra.mxu0 0
        %373 = vmatprep.subr.bf16.mxu0 0
        %374 = vmatpush1.bf16.msra.mxu0 0
        %375 = vmatprep.subr.bf16.mxu0 0
        %376 = vmatpush1.bf16.msra.mxu0 0
        %377 = vmatprep.subr.bf16.mxu0 0
        %378 = vmatpush1.bf16.msra.mxu0 %v364
        %379 = vmatprep.subr.bf16.mxu0 0
        %380 = vmatpush1.bf16.msra.mxu0 %v363
        %381 = vmatprep.subr.bf16.mxu0 0
        %382 = vmatpush1.bf16.msra.mxu0 %v362
        %383 = vmatprep.subr.bf16.mxu0 0
        %384 = vmatpush1.bf16.msra.mxu0 %v361
        %385 = vmatprep.subr.bf16.mxu0 0
        %386 = vmatpush2.bf16.msra.mxu0 0
        %387 = vmatprep.subr.bf16.mxu0 0
        %388 = vmatpush2.bf16.msra.mxu0 0
        %389 = vmatprep.subr.bf16.mxu0 0
        %390 = vmatpush2.bf16.msra.mxu0 0
        %391 = vmatprep.subr.bf16.mxu0 0
        %392 = vmatpush2.bf16.msra.mxu0 0
        %393 = vmatprep.subr.bf16.mxu0 0
        %394 = vmatpush2.bf16.msra.mxu0 0
        %395 = vmatprep.subr.bf16.mxu0 0
        %396 = vmatpush2.bf16.msra.mxu0 0
        %397 = vmatprep.subr.bf16.mxu0 0
        %398 = vmatpush2.bf16.msra.mxu0 0
        %399 = vmatprep.subr.bf16.mxu0 0
        %400 = vmatpush2.bf16.msra.mxu0 0
        %401 = vmatprep.mubr.bf16.mxu0 0
        %402 = vmatmul.mubr.bf16.gmra.mxu0 %v294
        %v403 = vpop.f32.mrf.mxu0
        %v404 = vadd.f32 0.0, %v403
        %v405 = vpop.f32.mrf.mxu0
        %v406 = vpop.f32.mrf.mxu0
        %v407 = vpop.f32.mrf.mxu0
        %408 = vdwg.mxu0
        %v409 = vpack.c.bf16 %v404, %v404
        %v410 = vld [vmem:[#allocation8] sm:$0xf]
        %v411 = vld [vmem:[#allocation8 + $0x4] sm:$0xf]
        %v412 = vld [vmem:[#allocation8 + $0x8] sm:$0xf]
        %v413 = vld [vmem:[#allocation8 + $0xc] sm:$0xf]
        %v414 = vld [vmem:[#allocation8 + $0x10] sm:$0xf]
        %v415 = vld [vmem:[#allocation8 + $0x14] sm:$0xf]
        %v416 = vld [vmem:[#allocation8 + $0x18] sm:$0xf]
        %v417 = vld [vmem:[#allocation8 + $0x1c] sm:$0xf]
        %v426 = vunpack.c.l.b16 %v410
        %v427 = vunpack.c.l.b16 %v411
        %v428 = vunpack.c.l.b16 %v412
        %v429 = vunpack.c.l.b16 %v413
        %v430 = vunpack.c.l.b16 %v414
        %v431 = vunpack.c.l.b16 %v415
        %v432 = vunpack.c.l.b16 %v416
        %v433 = vunpack.c.l.b16 %v417
        %v434 = vpack.c.b16 %v427, %v426
        %v435 = vpack.c.b16 %v429, %v428
        %v436 = vpack.c.b16 %v431, %v430
        %v437 = vpack.c.b16 %v433, %v432
        %442 = vmatprep.subr.bf16.mxu0 0
        %443 = vmatpush1.bf16.msra.mxu0 0
        %444 = vmatprep.subr.bf16.mxu0 0
        %445 = vmatpush1.bf16.msra.mxu0 0
        %446 = vmatprep.subr.bf16.mxu0 0
        %447 = vmatpush1.bf16.msra.mxu0 0
        %448 = vmatprep.subr.bf16.mxu0 0
        %449 = vmatpush1.bf16.msra.mxu0 0
        %450 = vmatprep.subr.bf16.mxu0 0
        %451 = vmatpush1.bf16.msra.mxu0 %v437
        %452 = vmatprep.subr.bf16.mxu0 0
        %453 = vmatpush1.bf16.msra.mxu0 %v436
        %454 = vmatprep.subr.bf16.mxu0 0
        %455 = vmatpush1.bf16.msra.mxu0 %v435
        %456 = vmatprep.subr.bf16.mxu0 0
        %457 = vmatpush1.bf16.msra.mxu0 %v434
        %458 = vmatprep.subr.bf16.mxu0 0
        %459 = vmatpush2.bf16.msra.mxu0 0
        %460 = vmatprep.subr.bf16.mxu0 0
        %461 = vmatpush2.bf16.msra.mxu0 0
        %462 = vmatprep.subr.bf16.mxu0 0
        %463 = vmatpush2.bf16.msra.mxu0 0
        %464 = vmatprep.subr.bf16.mxu0 0
        %465 = vmatpush2.bf16.msra.mxu0 0
        %466 = vmatprep.subr.bf16.mxu0 0
        %467 = vmatpush2.bf16.msra.mxu0 0
        %468 = vmatprep.subr.bf16.mxu0 0
        %469 = vmatpush2.bf16.msra.mxu0 0
        %470 = vmatprep.subr.bf16.mxu0 0
        %471 = vmatpush2.bf16.msra.mxu0 0
        %472 = vmatprep.subr.bf16.mxu0 0
        %473 = vmatpush2.bf16.msra.mxu0 0
        %474 = vmatprep.mubr.bf16.mxu0 0
        %475 = vmatmul.mubr.bf16.gmra.mxu0 %v294
        %v476 = vpop.f32.mrf.mxu0
        %v477 = vadd.f32 0.0, %v476
        %v478 = vpop.f32.mrf.mxu0
        %v479 = vpop.f32.mrf.mxu0
        %v480 = vpop.f32.mrf.mxu0
        %481 = vdwg.mxu0
        %v482 = vpack.c.bf16 %v477, %v477
        %484 = vrot.lane.b32.xlu0 %v336, 112
        %v485 = vpop.permute.xlu0 %484
        %486 = vrot.lane.b32.xlu0 %v336, 96
        %v487 = vpop.permute.xlu0 %486
        %488 = vrot.lane.b32.xlu0 %v336, 80
        %v489 = vpop.permute.xlu0 %488
        %v491 = vunpack.c.l.s4 1983009808
        %v492 = vunpack.c.0.s8 %v491
        %v493 = vlaneseq
        %v494 = vshrl.u32 %v493, 7
        %v495 = vsub.s32 %v492, %v494
        %v496 = vrot.slane %v336, %v495
        %v499 = vunpack.c.l.s4 1983009808
        %v500 = vunpack.c.0.s8 %v499
        %v501 = vlaneseq
        %v502 = vshrl.u32 %v501, 7
        %v503 = vsub.s32 %v500, %v502
        %v504 = vrot.slane %v487, %v503
        %v505 = vcombine.low %v496, %v504
        %v506 = vcombine.high %v496, %v504
        %v508 = vunpack.c.l.s4 1934713408
        %v509 = vunpack.c.0.s8 %v508
        %v510 = vlaneseq
        %v511 = vshrl.u32 %v510, 7
        %v512 = vsub.s32 %v509, %v511
        %v513 = vrot.slane %v505, %v512
        %v515 = vunpack.c.l.s4 1934713408
        %v516 = vunpack.c.0.s8 %v515
        %v517 = vlaneseq
        %v518 = vshrl.u32 %v517, 7
        %v519 = vsub.s32 %v516, %v518
        %v520 = vrot.slane %v506, %v519
        %v521 = vcombine.high %v513, 0
        %v522 = vcombine.high %v520, 0
        %v525 = vunpack.c.l.s4 1983009808
        %v526 = vunpack.c.0.s8 %v525
        %v527 = vlaneseq
        %v528 = vshrl.u32 %v527, 7
        %v529 = vsub.s32 %v526, %v528
        %v530 = vrot.slane %v485, %v529
        %v533 = vunpack.c.l.s4 1983009808
        %v534 = vunpack.c.0.s8 %v533
        %v535 = vlaneseq
        %v536 = vshrl.u32 %v535, 7
        %v537 = vsub.s32 %v534, %v536
        %v538 = vrot.slane %v489, %v537
        %v539 = vcombine.low %v530, %v538
        %v540 = vcombine.high %v530, %v538
        %v542 = vunpack.c.l.s4 1934713408
        %v543 = vunpack.c.0.s8 %v542
        %v544 = vlaneseq
        %v545 = vshrl.u32 %v544, 7
        %v546 = vsub.s32 %v543, %v545
        %v547 = vrot.slane %v539, %v546
        %v549 = vunpack.c.l.s4 1934713408
        %v550 = vunpack.c.0.s8 %v549
        %v551 = vlaneseq
        %v552 = vshrl.u32 %v551, 7
        %v553 = vsub.s32 %v550, %v552
        %v554 = vrot.slane %v540, %v553
        %v555 = vcombine.high %v547, 0
        %v556 = vcombine.high %v554, 0
        %v559 = vpack.i.b16 %v547, %v513
        %v561 = vshrl.u32 %v513, 16
        %v562 = vshrl.u32 %v547, 16
        %v563 = vpack.i.b16 %v562, %v561
        %v567 = vpack.i.b16 %v555, %v521
        %v569 = vshrl.u32 %v521, 16
        %v570 = vshrl.u32 %v555, 16
        %v571 = vpack.i.b16 %v570, %v569
        %v575 = vpack.i.b16 %v554, %v520
        %v577 = vshrl.u32 %v520, 16
        %v578 = vshrl.u32 %v554, 16
        %v579 = vpack.i.b16 %v578, %v577
        %v583 = vpack.i.b16 %v556, %v522
        %v585 = vshrl.u32 %v522, 16
        %v586 = vshrl.u32 %v556, 16
        %v587 = vpack.i.b16 %v586, %v585
        %v589 = vcombine.low %v559, %v575
        %v591 = vunpack.c.l.s4 1983009808
        %v592 = vunpack.c.0.s8 %v591
        %v593 = vlaneseq
        %v594 = vshrl.u32 %v593, 7
        %v595 = vsub.s32 %v592, %v594
        %v596 = vrot.slane %v589, %v595
        %v597 = vcombine.low %v567, %v583
        %v599 = vunpack.c.l.s4 1983009808
        %v600 = vunpack.c.0.s8 %v599
        %v601 = vlaneseq
        %v602 = vshrl.u32 %v601, 7
        %v603 = vsub.s32 %v600, %v602
        %v604 = vrot.slane %v597, %v603
        %v605 = vcombine.low %v596, %v604
        %v607 = vunpack.c.l.s4 1934713408
        %v608 = vunpack.c.0.s8 %v607
        %v609 = vlaneseq
        %v610 = vshrl.u32 %v609, 7
        %v611 = vsub.s32 %v608, %v610
        %v612 = vrot.slane %v605, %v611
        %v613 = vcombine.high %v612, 0
        %v614 = vcombine.low %v563, %v579
        %v616 = vunpack.c.l.s4 1983009808
        %v617 = vunpack.c.0.s8 %v616
        %v618 = vlaneseq
        %v619 = vshrl.u32 %v618, 7
        %v620 = vsub.s32 %v617, %v619
        %v621 = vrot.slane %v614, %v620
        %v622 = vcombine.low %v571, %v587
        %v624 = vunpack.c.l.s4 1983009808
        %v625 = vunpack.c.0.s8 %v624
        %v626 = vlaneseq
        %v627 = vshrl.u32 %v626, 7
        %v628 = vsub.s32 %v625, %v627
        %v629 = vrot.slane %v622, %v628
        %v630 = vcombine.low %v621, %v629
        %v632 = vunpack.c.l.s4 1934713408
        %v633 = vunpack.c.0.s8 %v632
        %v634 = vlaneseq
        %v635 = vshrl.u32 %v634, 7
        %v636 = vsub.s32 %v633, %v635
        %v637 = vrot.slane %v630, %v636
        %v638 = vcombine.high %v637, 0
        %v641 = vpack.i.b16 %v637, %v612
        %v642 = vshrl.u32 %v612, 16
        %v643 = vshrl.u32 %v637, 16
        %v644 = vpack.i.b16 %v643, %v642
        %v647 = vpack.i.b16 %v638, %v613
        %v648 = vshrl.u32 %v613, 16
        %v649 = vshrl.u32 %v638, 16
        %v650 = vpack.i.b16 %v649, %v648
        %652 = vrot.lane.b32.xlu0 %v409, 112
        %v653 = vpop.permute.xlu0 %652
        %654 = vrot.lane.b32.xlu0 %v409, 96
        %v655 = vpop.permute.xlu0 %654
        %656 = vrot.lane.b32.xlu0 %v409, 80
        %v657 = vpop.permute.xlu0 %656
        %v659 = vunpack.c.l.s4 1983009808
        %v660 = vunpack.c.0.s8 %v659
        %v661 = vlaneseq
        %v662 = vshrl.u32 %v661, 7
        %v663 = vsub.s32 %v660, %v662
        %v664 = vrot.slane %v409, %v663
        %v667 = vunpack.c.l.s4 1983009808
        %v668 = vunpack.c.0.s8 %v667
        %v669 = vlaneseq
        %v670 = vshrl.u32 %v669, 7
        %v671 = vsub.s32 %v668, %v670
        %v672 = vrot.slane %v655, %v671
        %v673 = vcombine.low %v664, %v672
        %v674 = vcombine.high %v664, %v672
        %v676 = vunpack.c.l.s4 1934713408
        %v677 = vunpack.c.0.s8 %v676
        %v678 = vlaneseq
        %v679 = vshrl.u32 %v678, 7
        %v680 = vsub.s32 %v677, %v679
        %v681 = vrot.slane %v673, %v680
        %v683 = vunpack.c.l.s4 1934713408
        %v684 = vunpack.c.0.s8 %v683
        %v685 = vlaneseq
        %v686 = vshrl.u32 %v685, 7
        %v687 = vsub.s32 %v684, %v686
        %v688 = vrot.slane %v674, %v687
        %v689 = vcombine.high %v681, 0
        %v690 = vcombine.high %v688, 0
        %v693 = vunpack.c.l.s4 1983009808
        %v694 = vunpack.c.0.s8 %v693
        %v695 = vlaneseq
        %v696 = vshrl.u32 %v695, 7
        %v697 = vsub.s32 %v694, %v696
        %v698 = vrot.slane %v653, %v697
        %v701 = vunpack.c.l.s4 1983009808
        %v702 = vunpack.c.0.s8 %v701
        %v703 = vlaneseq
        %v704 = vshrl.u32 %v703, 7
        %v705 = vsub.s32 %v702, %v704
        %v706 = vrot.slane %v657, %v705
        %v707 = vcombine.low %v698, %v706
        %v708 = vcombine.high %v698, %v706
        %v710 = vunpack.c.l.s4 1934713408
        %v711 = vunpack.c.0.s8 %v710
        %v712 = vlaneseq
        %v713 = vshrl.u32 %v712, 7
        %v714 = vsub.s32 %v711, %v713
        %v715 = vrot.slane %v707, %v714
        %v717 = vunpack.c.l.s4 1934713408
        %v718 = vunpack.c.0.s8 %v717
        %v719 = vlaneseq
        %v720 = vshrl.u32 %v719, 7
        %v721 = vsub.s32 %v718, %v720
        %v722 = vrot.slane %v708, %v721
        %v723 = vcombine.high %v715, 0
        %v724 = vcombine.high %v722, 0
        %v727 = vpack.i.b16 %v715, %v681
        %v729 = vshrl.u32 %v681, 16
        %v730 = vshrl.u32 %v715, 16
        %v731 = vpack.i.b16 %v730, %v729
        %v735 = vpack.i.b16 %v723, %v689
        %v737 = vshrl.u32 %v689, 16
        %v738 = vshrl.u32 %v723, 16
        %v739 = vpack.i.b16 %v738, %v737
        %v743 = vpack.i.b16 %v722, %v688
        %v745 = vshrl.u32 %v688, 16
        %v746 = vshrl.u32 %v722, 16
        %v747 = vpack.i.b16 %v746, %v745
        %v751 = vpack.i.b16 %v724, %v690
        %v753 = vshrl.u32 %v690, 16
        %v754 = vshrl.u32 %v724, 16
        %v755 = vpack.i.b16 %v754, %v753
        %v757 = vcombine.low %v727, %v743
        %v759 = vunpack.c.l.s4 1983009808
        %v760 = vunpack.c.0.s8 %v759
        %v761 = vlaneseq
        %v762 = vshrl.u32 %v761, 7
        %v763 = vsub.s32 %v760, %v762
        %v764 = vrot.slane %v757, %v763
        %v765 = vcombine.low %v735, %v751
        %v767 = vunpack.c.l.s4 1983009808
        %v768 = vunpack.c.0.s8 %v767
        %v769 = vlaneseq
        %v770 = vshrl.u32 %v769, 7
        %v771 = vsub.s32 %v768, %v770
        %v772 = vrot.slane %v765, %v771
        %v773 = vcombine.low %v764, %v772
        %v775 = vunpack.c.l.s4 1934713408
        %v776 = vunpack.c.0.s8 %v775
        %v777 = vlaneseq
        %v778 = vshrl.u32 %v777, 7
        %v779 = vsub.s32 %v776, %v778
        %v780 = vrot.slane %v773, %v779
        %v781 = vcombine.high %v780, 0
        %v782 = vcombine.low %v731, %v747
        %v784 = vunpack.c.l.s4 1983009808
        %v785 = vunpack.c.0.s8 %v784
        %v786 = vlaneseq
        %v787 = vshrl.u32 %v786, 7
        %v788 = vsub.s32 %v785, %v787
        %v789 = vrot.slane %v782, %v788
        %v790 = vcombine.low %v739, %v755
        %v792 = vunpack.c.l.s4 1983009808
        %v793 = vunpack.c.0.s8 %v792
        %v794 = vlaneseq
        %v795 = vshrl.u32 %v794, 7
        %v796 = vsub.s32 %v793, %v795
        %v797 = vrot.slane %v790, %v796
        %v798 = vcombine.low %v789, %v797
        %v800 = vunpack.c.l.s4 1934713408
        %v801 = vunpack.c.0.s8 %v800
        %v802 = vlaneseq
        %v803 = vshrl.u32 %v802, 7
        %v804 = vsub.s32 %v801, %v803
        %v805 = vrot.slane %v798, %v804
        %v806 = vcombine.high %v805, 0
        %v809 = vpack.i.b16 %v805, %v780
        %v810 = vshrl.u32 %v780, 16
        %v811 = vshrl.u32 %v805, 16
        %v812 = vpack.i.b16 %v811, %v810
        %v815 = vpack.i.b16 %v806, %v781
        %v816 = vshrl.u32 %v781, 16
        %v817 = vshrl.u32 %v806, 16
        %v818 = vpack.i.b16 %v817, %v816
        %820 = vrot.lane.b32.xlu0 %v482, 112
        %v821 = vpop.permute.xlu0 %820
        %822 = vrot.lane.b32.xlu0 %v482, 96
        %v823 = vpop.permute.xlu0 %822
        %824 = vrot.lane.b32.xlu0 %v482, 80
        %v825 = vpop.permute.xlu0 %824
        %v827 = vunpack.c.l.s4 1983009808
        %v828 = vunpack.c.0.s8 %v827
        %v829 = vlaneseq
        %v830 = vshrl.u32 %v829, 7
        %v831 = vsub.s32 %v828, %v830
        %v832 = vrot.slane %v482, %v831
        %v835 = vunpack.c.l.s4 1983009808
        %v836 = vunpack.c.0.s8 %v835
        %v837 = vlaneseq
        %v838 = vshrl.u32 %v837, 7
        %v839 = vsub.s32 %v836, %v838
        %v840 = vrot.slane %v823, %v839
        %v841 = vcombine.low %v832, %v840
        %v842 = vcombine.high %v832, %v840
        %v844 = vunpack.c.l.s4 1934713408
        %v845 = vunpack.c.0.s8 %v844
        %v846 = vlaneseq
        %v847 = vshrl.u32 %v846, 7
        %v848 = vsub.s32 %v845, %v847
        %v849 = vrot.slane %v841, %v848
        %v851 = vunpack.c.l.s4 1934713408
        %v852 = vunpack.c.0.s8 %v851
        %v853 = vlaneseq
        %v854 = vshrl.u32 %v853, 7
        %v855 = vsub.s32 %v852, %v854
        %v856 = vrot.slane %v842, %v855
        %v857 = vcombine.high %v849, 0
        %v858 = vcombine.high %v856, 0
        %v861 = vunpack.c.l.s4 1983009808
        %v862 = vunpack.c.0.s8 %v861
        %v863 = vlaneseq
        %v864 = vshrl.u32 %v863, 7
        %v865 = vsub.s32 %v862, %v864
        %v866 = vrot.slane %v821, %v865
        %v869 = vunpack.c.l.s4 1983009808
        %v870 = vunpack.c.0.s8 %v869
        %v871 = vlaneseq
        %v872 = vshrl.u32 %v871, 7
        %v873 = vsub.s32 %v870, %v872
        %v874 = vrot.slane %v825, %v873
        %v875 = vcombine.low %v866, %v874
        %v876 = vcombine.high %v866, %v874
        %v878 = vunpack.c.l.s4 1934713408
        %v879 = vunpack.c.0.s8 %v878
        %v880 = vlaneseq
        %v881 = vshrl.u32 %v880, 7
        %v882 = vsub.s32 %v879, %v881
        %v883 = vrot.slane %v875, %v882
        %v885 = vunpack.c.l.s4 1934713408
        %v886 = vunpack.c.0.s8 %v885
        %v887 = vlaneseq
        %v888 = vshrl.u32 %v887, 7
        %v889 = vsub.s32 %v886, %v888
        %v890 = vrot.slane %v876, %v889
        %v891 = vcombine.high %v883, 0
        %v892 = vcombine.high %v890, 0
        %v895 = vpack.i.b16 %v883, %v849
        %v897 = vshrl.u32 %v849, 16
        %v898 = vshrl.u32 %v883, 16
        %v899 = vpack.i.b16 %v898, %v897
        %v903 = vpack.i.b16 %v891, %v857
        %v905 = vshrl.u32 %v857, 16
        %v906 = vshrl.u32 %v891, 16
        %v907 = vpack.i.b16 %v906, %v905
        %v911 = vpack.i.b16 %v890, %v856
        %v913 = vshrl.u32 %v856, 16
        %v914 = vshrl.u32 %v890, 16
        %v915 = vpack.i.b16 %v914, %v913
        %v919 = vpack.i.b16 %v892, %v858
        %v921 = vshrl.u32 %v858, 16
        %v922 = vshrl.u32 %v892, 16
        %v923 = vpack.i.b16 %v922, %v921
        %v925 = vcombine.low %v895, %v911
        %v927 = vunpack.c.l.s4 1983009808
        %v928 = vunpack.c.0.s8 %v927
        %v929 = vlaneseq
        %v930 = vshrl.u32 %v929, 7
        %v931 = vsub.s32 %v928, %v930
        %v932 = vrot.slane %v925, %v931
        %v933 = vcombine.low %v903, %v919
        %v935 = vunpack.c.l.s4 1983009808
        %v936 = vunpack.c.0.s8 %v935
        %v937 = vlaneseq
        %v938 = vshrl.u32 %v937, 7
        %v939 = vsub.s32 %v936, %v938
        %v940 = vrot.slane %v933, %v939
        %v941 = vcombine.low %v932, %v940
        %v943 = vunpack.c.l.s4 1934713408
        %v944 = vunpack.c.0.s8 %v943
        %v945 = vlaneseq
        %v946 = vshrl.u32 %v945, 7
        %v947 = vsub.s32 %v944, %v946
        %v948 = vrot.slane %v941, %v947
        %v949 = vcombine.high %v948, 0
        %v950 = vcombine.low %v899, %v915
        %v952 = vunpack.c.l.s4 1983009808
        %v953 = vunpack.c.0.s8 %v952
        %v954 = vlaneseq
        %v955 = vshrl.u32 %v954, 7
        %v956 = vsub.s32 %v953, %v955
        %v957 = vrot.slane %v950, %v956
        %v958 = vcombine.low %v907, %v923
        %v960 = vunpack.c.l.s4 1983009808
        %v961 = vunpack.c.0.s8 %v960
        %v962 = vlaneseq
        %v963 = vshrl.u32 %v962, 7
        %v964 = vsub.s32 %v961, %v963
        %v965 = vrot.slane %v958, %v964
        %v966 = vcombine.low %v957, %v965
        %v968 = vunpack.c.l.s4 1934713408
        %v969 = vunpack.c.0.s8 %v968
        %v970 = vlaneseq
        %v971 = vshrl.u32 %v970, 7
        %v972 = vsub.s32 %v969, %v971
        %v973 = vrot.slane %v966, %v972
        %v974 = vcombine.high %v973, 0
        %v977 = vpack.i.b16 %v973, %v948
        %v978 = vshrl.u32 %v948, 16
        %v979 = vshrl.u32 %v973, 16
        %v980 = vpack.i.b16 %v979, %v978
        %v983 = vpack.i.b16 %v974, %v949
        %v984 = vshrl.u32 %v949, 16
        %v985 = vshrl.u32 %v974, 16
        %v986 = vpack.i.b16 %v985, %v984
        %vm987 = vcmask 130048
        %v989 = vsel %vm987, %v641, 0
        %v992 = vsel %vm987, %v809, 0
        %994 = vmatprep.subr.bf16.mxu0 0
        %995 = vmatpush1.bf16.xpose.msra.mxu0 0
        %996 = vmatprep.subr.bf16.mxu0 0
        %997 = vmatpush1.bf16.xpose.msra.mxu0 0
        %998 = vmatprep.subr.bf16.mxu0 0
        %999 = vmatpush1.bf16.xpose.msra.mxu0 0
        %1000 = vmatprep.subr.bf16.mxu0 0
        %1001 = vmatpush1.bf16.xpose.msra.mxu0 0
        %1002 = vmatprep.subr.bf16.mxu0 0
        %1003 = vmatpush1.bf16.xpose.msra.mxu0 0
        %1004 = vmatprep.subr.bf16.mxu0 0
        %1005 = vmatpush1.bf16.xpose.msra.mxu0 0
        %1006 = vmatprep.subr.bf16.mxu0 0
        %1007 = vmatpush1.bf16.xpose.msra.mxu0 0
        %1008 = vmatprep.subr.bf16.mxu0 0
        %1009 = vmatpush1.bf16.xpose.msra.mxu0 %v992
        %1010 = vmatprep.subr.bf16.mxu0 0
        %1011 = vmatpush2.bf16.xpose.msra.mxu0 0
        %1012 = vmatprep.subr.bf16.mxu0 0
        %1013 = vmatpush2.bf16.xpose.msra.mxu0 0
        %1014 = vmatprep.subr.bf16.mxu0 0
        %1015 = vmatpush2.bf16.xpose.msra.mxu0 0
        %1016 = vmatprep.subr.bf16.mxu0 0
        %1017 = vmatpush2.bf16.xpose.msra.mxu0 0
        %1018 = vmatprep.subr.bf16.mxu0 0
        %1019 = vmatpush2.bf16.xpose.msra.mxu0 0
        %1020 = vmatprep.subr.bf16.mxu0 0
        %1021 = vmatpush2.bf16.xpose.msra.mxu0 0
        %1022 = vmatprep.subr.bf16.mxu0 0
        %1023 = vmatpush2.bf16.xpose.msra.mxu0 0
        %1024 = vmatprep.subr.bf16.mxu0 0
        %1025 = vmatpush2.bf16.xpose.msra.mxu0 0
        %1026 = vmatprep.mubr.bf16.mxu0 0
        %1027 = vmatmul.mubr.bf16.gmra.mxu0 %v989
        %v1028 = vpop.f32.mrf.mxu0
        %v1029 = vadd.f32 0.0, %v1028
        %v1030 = vpop.f32.mrf.mxu0
        %v1031 = vpop.f32.mrf.mxu0
        %v1032 = vpop.f32.mrf.mxu0
        %1033 = vdwg.mxu0
        %v1035 = vsel %vm987, %v644, 0
        %v1038 = vsel %vm987, %v812, 0
        %1040 = vmatprep.subr.bf16.mxu0 0
        %1041 = vmatpush1.bf16.xpose.msra.mxu0 0
        %1042 = vmatprep.subr.bf16.mxu0 0
        %1043 = vmatpush1.bf16.xpose.msra.mxu0 0
        %1044 = vmatprep.subr.bf16.mxu0 0
        %1045 = vmatpush1.bf16.xpose.msra.mxu0 0
        %1046 = vmatprep.subr.bf16.mxu0 0
        %1047 = vmatpush1.bf16.xpose.msra.mxu0 0
        %1048 = vmatprep.subr.bf16.mxu0 0
        %1049 = vmatpush1.bf16.xpose.msra.mxu0 0
        %1050 = vmatprep.subr.bf16.mxu0 0
        %1051 = vmatpush1.bf16.xpose.msra.mxu0 0
        %1052 = vmatprep.subr.bf16.mxu0 0
        %1053 = vmatpush1.bf16.xpose.msra.mxu0 0
        %1054 = vmatprep.subr.bf16.mxu0 0
        %1055 = vmatpush1.bf16.xpose.msra.mxu0 %v1038
        %1056 = vmatprep.subr.bf16.mxu0 0
        %1057 = vmatpush2.bf16.xpose.msra.mxu0 0
        %1058 = vmatprep.subr.bf16.mxu0 0
        %1059 = vmatpush2.bf16.xpose.msra.mxu0 0
        %1060 = vmatprep.subr.bf16.mxu0 0
        %1061 = vmatpush2.bf16.xpose.msra.mxu0 0
        %1062 = vmatprep.subr.bf16.mxu0 0
        %1063 = vmatpush2.bf16.xpose.msra.mxu0 0
        %1064 = vmatprep.subr.bf16.mxu0 0
        %1065 = vmatpush2.bf16.xpose.msra.mxu0 0
        %1066 = vmatprep.subr.bf16.mxu0 0
        %1067 = vmatpush2.bf16.xpose.msra.mxu0 0
        %1068 = vmatprep.subr.bf16.mxu0 0
        %1069 = vmatpush2.bf16.xpose.msra.mxu0 0
        %1070 = vmatprep.subr.bf16.mxu0 0
        %1071 = vmatpush2.bf16.xpose.msra.mxu0 0
        %1072 = vmatprep.mubr.bf16.mxu0 0
        %1073 = vmatmul.mubr.bf16.gmra.mxu0 %v1035
        %v1074 = vpop.f32.mrf.mxu0
        %v1075 = vadd.f32 0.0, %v1074
        %v1076 = vpop.f32.mrf.mxu0
        %v1077 = vpop.f32.mrf.mxu0
        %v1078 = vpop.f32.mrf.mxu0
        %1079 = vdwg.mxu0
        %v1081 = vsel %vm987, %v647, 0
        %v1084 = vsel %vm987, %v815, 0
        %1086 = vmatprep.subr.bf16.mxu0 0
        %1087 = vmatpush1.bf16.xpose.msra.mxu0 0
        %1088 = vmatprep.subr.bf16.mxu0 0
        %1089 = vmatpush1.bf16.xpose.msra.mxu0 0
        %1090 = vmatprep.subr.bf16.mxu0 0
        %1091 = vmatpush1.bf16.xpose.msra.mxu0 0
        %1092 = vmatprep.subr.bf16.mxu0 0
        %1093 = vmatpush1.bf16.xpose.msra.mxu0 0
        %1094 = vmatprep.subr.bf16.mxu0 0
        %1095 = vmatpush1.bf16.xpose.msra.mxu0 0
        %1096 = vmatprep.subr.bf16.mxu0 0
        %1097 = vmatpush1.bf16.xpose.msra.mxu0 0
        %1098 = vmatprep.subr.bf16.mxu0 0
        %1099 = vmatpush1.bf16.xpose.msra.mxu0 0
        %1100 = vmatprep.subr.bf16.mxu0 0
        %1101 = vmatpush1.bf16.xpose.msra.mxu0 %v1084
        %1102 = vmatprep.subr.bf16.mxu0 0
        %1103 = vmatpush2.bf16.xpose.msra.mxu0 0
        %1104 = vmatprep.subr.bf16.mxu0 0
        %1105 = vmatpush2.bf16.xpose.msra.mxu0 0
        %1106 = vmatprep.subr.bf16.mxu0 0
        %1107 = vmatpush2.bf16.xpose.msra.mxu0 0
        %1108 = vmatprep.subr.bf16.mxu0 0
        %1109 = vmatpush2.bf16.xpose.msra.mxu0 0
        %1110 = vmatprep.subr.bf16.mxu0 0
        %1111 = vmatpush2.bf16.xpose.msra.mxu0 0
        %1112 = vmatprep.subr.bf16.mxu0 0
        %1113 = vmatpush2.bf16.xpose.msra.mxu0 0
        %1114 = vmatprep.subr.bf16.mxu0 0
        %1115 = vmatpush2.bf16.xpose.msra.mxu0 0
        %1116 = vmatprep.subr.bf16.mxu0 0
        %1117 = vmatpush2.bf16.xpose.msra.mxu0 0
        %1118 = vmatprep.mubr.bf16.mxu0 0
        %1119 = vmatmul.mubr.bf16.gmra.mxu0 %v1081
        %v1120 = vpop.f32.mrf.mxu0
        %v1121 = vadd.f32 0.0, %v1120
        %v1122 = vpop.f32.mrf.mxu0
        %v1123 = vpop.f32.mrf.mxu0
        %v1124 = vpop.f32.mrf.mxu0
        %1125 = vdwg.mxu0
        %v1127 = vsel %vm987, %v650, 0
        %v1130 = vsel %vm987, %v818, 0
        %1132 = vmatprep.subr.bf16.mxu0 0
        %1133 = vmatpush1.bf16.xpose.msra.mxu0 0
        %1134 = vmatprep.subr.bf16.mxu0 0
        %1135 = vmatpush1.bf16.xpose.msra.mxu0 0
        %1136 = vmatprep.subr.bf16.mxu0 0
        %1137 = vmatpush1.bf16.xpose.msra.mxu0 0
        %1138 = vmatprep.subr.bf16.mxu0 0
        %1139 = vmatpush1.bf16.xpose.msra.mxu0 0
        %1140 = vmatprep.subr.bf16.mxu0 0
        %1141 = vmatpush1.bf16.xpose.msra.mxu0 0
        %1142 = vmatprep.subr.bf16.mxu0 0
        %1143 = vmatpush1.bf16.xpose.msra.mxu0 0
        %1144 = vmatprep.subr.bf16.mxu0 0
        %1145 = vmatpush1.bf16.xpose.msra.mxu0 0
        %1146 = vmatprep.subr.bf16.mxu0 0
        %1147 = vmatpush1.bf16.xpose.msra.mxu0 %v1130
        %1148 = vmatprep.subr.bf16.mxu0 0
        %1149 = vmatpush2.bf16.xpose.msra.mxu0 0
        %1150 = vmatprep.subr.bf16.mxu0 0
        %1151 = vmatpush2.bf16.xpose.msra.mxu0 0
        %1152 = vmatprep.subr.bf16.mxu0 0
        %1153 = vmatpush2.bf16.xpose.msra.mxu0 0
        %1154 = vmatprep.subr.bf16.mxu0 0
        %1155 = vmatpush2.bf16.xpose.msra.mxu0 0
        %1156 = vmatprep.subr.bf16.mxu0 0
        %1157 = vmatpush2.bf16.xpose.msra.mxu0 0
        %1158 = vmatprep.subr.bf16.mxu0 0
        %1159 = vmatpush2.bf16.xpose.msra.mxu0 0
        %1160 = vmatprep.subr.bf16.mxu0 0
        %1161 = vmatpush2.bf16.xpose.msra.mxu0 0
        %1162 = vmatprep.subr.bf16.mxu0 0
        %1163 = vmatpush2.bf16.xpose.msra.mxu0 0
        %1164 = vmatprep.mubr.bf16.mxu0 0
        %1165 = vmatmul.mubr.bf16.gmra.mxu0 %v1127
        %v1166 = vpop.f32.mrf.mxu0
        %v1167 = vadd.f32 0.0, %v1166
        %v1168 = vpop.f32.mrf.mxu0
        %v1169 = vpop.f32.mrf.mxu0
        %v1170 = vpop.f32.mrf.mxu0
        %1171 = vdwg.mxu0
        %vm1172 = vcmask 64512
        %v1173 = vsel %vm1172, %v1029, -inf
        %1174 = vmax.xlane.f32.xlu0 %v1173
        %v1175 = vpop.xlane.xlu0 %1174
        %v1176 = vsel %vm1172, %v1075, -inf
        %1177 = vmax.xlane.f32.xlu0 %v1176
        %v1178 = vpop.xlane.xlu0 %1177
        %v1179 = vsel %vm1172, %v1121, -inf
        %1180 = vmax.xlane.f32.xlu0 %v1179
        %v1181 = vpop.xlane.xlu0 %1180
        %v1182 = vsel %vm1172, %v1167, -inf
        %1183 = vmax.xlane.f32.xlu0 %v1182
        %v1184 = vpop.xlane.xlu0 %1183
        %v1185 = vsub.f32 %v1029, %v1175
        %v1186 = vsub.f32 %v1075, %v1178
        %v1187 = vsub.f32 %v1121, %v1181
        %v1188 = vsub.f32 %v1167, %v1184
        %v1189 = vmul.f32 %v1185, 1.442695
        %v1190 = vpow.pop %v1189
        %v1191 = vmul.f32 %v1186, 1.442695
        %v1192 = vpow.pop %v1191
        %v1193 = vmul.f32 %v1187, 1.442695
        %v1194 = vpow.pop %v1193
        %v1195 = vmul.f32 %v1188, 1.442695
        %v1196 = vpow.pop %v1195
        %v1197 = vsel %vm1172, %v1190, 0.0
        %1198 = vadd.xlane.f32.xlu0 %v1197
        %v1199 = vpop.xlane.xlu0 %1198
        %v1200 = vsel %vm1172, %v1192, 0.0
        %1201 = vadd.xlane.f32.xlu0 %v1200
        %v1202 = vpop.xlane.xlu0 %1201
        %v1203 = vsel %vm1172, %v1194, 0.0
        %1204 = vadd.xlane.f32.xlu0 %v1203
        %v1205 = vpop.xlane.xlu0 %1204
        %v1206 = vsel %vm1172, %v1196, 0.0
        %1207 = vadd.xlane.f32.xlu0 %v1206
        %v1208 = vpop.xlane.xlu0 %1207
        %v1209 = vrcp.pop %v1199
        %v1210 = vrcp.pop %v1202
        %v1211 = vrcp.pop %v1205
        %v1212 = vrcp.pop %v1208
        %v1213 = vmul.f32 %v1190, %v1209
        %v1214 = vmul.f32 %v1192, %v1210
        %v1215 = vmul.f32 %v1194, %v1211
        %v1216 = vmul.f32 %v1196, %v1212
        %v1217 = vpack.c.bf16 %v1213, %v1213
        %v1218 = vpack.c.bf16 %v1214, %v1214
        %v1219 = vpack.c.bf16 %v1215, %v1215
        %v1220 = vpack.c.bf16 %v1216, %v1216
        %v1222 = vsel %vm1172, %v1217, 0
        %vm1224 = vcmask 1043456
        %v1226 = vsel %vm1224, %v977, 0
        %1228 = vmatprep.subr.bf16.mxu0 0
        %1229 = vmatpush1.bf16.msra.mxu0 0
        %1230 = vmatprep.subr.bf16.mxu0 0
        %1231 = vmatpush1.bf16.msra.mxu0 0
        %1232 = vmatprep.subr.bf16.mxu0 0
        %1233 = vmatpush1.bf16.msra.mxu0 0
        %1234 = vmatprep.subr.bf16.mxu0 0
        %1235 = vmatpush1.bf16.msra.mxu0 0
        %1236 = vmatprep.subr.bf16.mxu0 0
        %1237 = vmatpush1.bf16.msra.mxu0 0
        %1238 = vmatprep.subr.bf16.mxu0 0
        %1239 = vmatpush1.bf16.msra.mxu0 0
        %1240 = vmatprep.subr.bf16.mxu0 0
        %1241 = vmatpush1.bf16.msra.mxu0 0
        %1242 = vmatprep.subr.bf16.mxu0 0
        %1243 = vmatpush1.bf16.msra.mxu0 %v1226
        %1244 = vmatprep.subr.bf16.mxu0 0
        %1245 = vmatpush2.bf16.msra.mxu0 0
        %1246 = vmatprep.subr.bf16.mxu0 0
        %1247 = vmatpush2.bf16.msra.mxu0 0
        %1248 = vmatprep.subr.bf16.mxu0 0
        %1249 = vmatpush2.bf16.msra.mxu0 0
        %1250 = vmatprep.subr.bf16.mxu0 0
        %1251 = vmatpush2.bf16.msra.mxu0 0
        %1252 = vmatprep.subr.bf16.mxu0 0
        %1253 = vmatpush2.bf16.msra.mxu0 0
        %1254 = vmatprep.subr.bf16.mxu0 0
        %1255 = vmatpush2.bf16.msra.mxu0 0
        %1256 = vmatprep.subr.bf16.mxu0 0
        %1257 = vmatpush2.bf16.msra.mxu0 0
        %1258 = vmatprep.subr.bf16.mxu0 0
        %1259 = vmatpush2.bf16.msra.mxu0 0
        %1260 = vmatprep.mubr.bf16.mxu0 0
        %1261 = vmatmul.mubr.bf16.gmra.mxu0 %v1222
        %v1262 = vpop.f32.mrf.mxu0
        %v1263 = vadd.f32 0.0, %v1262
        %v1264 = vpop.f32.mrf.mxu0
        %v1265 = vpop.f32.mrf.mxu0
        %v1266 = vpop.f32.mrf.mxu0
        %1267 = vdwg.mxu0
        %v1269 = vsel %vm1172, %v1218, 0
        %v1272 = vsel %vm1224, %v980, 0
        %1274 = vmatprep.subr.bf16.mxu0 0
        %1275 = vmatpush1.bf16.msra.mxu0 0
        %1276 = vmatprep.subr.bf16.mxu0 0
        %1277 = vmatpush1.bf16.msra.mxu0 0
        %1278 = vmatprep.subr.bf16.mxu0 0
        %1279 = vmatpush1.bf16.msra.mxu0 0
        %1280 = vmatprep.subr.bf16.mxu0 0
        %1281 = vmatpush1.bf16.msra.mxu0 0
        %1282 = vmatprep.subr.bf16.mxu0 0
        %1283 = vmatpush1.bf16.msra.mxu0 0
        %1284 = vmatprep.subr.bf16.mxu0 0
        %1285 = vmatpush1.bf16.msra.mxu0 0
        %1286 = vmatprep.subr.bf16.mxu0 0
        %1287 = vmatpush1.bf16.msra.mxu0 0
        %1288 = vmatprep.subr.bf16.mxu0 0
        %1289 = vmatpush1.bf16.msra.mxu0 %v1272
        %1290 = vmatprep.subr.bf16.mxu0 0
        %1291 = vmatpush2.bf16.msra.mxu0 0
        %1292 = vmatprep.subr.bf16.mxu0 0
        %1293 = vmatpush2.bf16.msra.mxu0 0
        %1294 = vmatprep.subr.bf16.mxu0 0
        %1295 = vmatpush2.bf16.msra.mxu0 0
        %1296 = vmatprep.subr.bf16.mxu0 0
        %1297 = vmatpush2.bf16.msra.mxu0 0
        %1298 = vmatprep.subr.bf16.mxu0 0
        %1299 = vmatpush2.bf16.msra.mxu0 0
        %1300 = vmatprep.subr.bf16.mxu0 0
        %1301 = vmatpush2.bf16.msra.mxu0 0
        %1302 = vmatprep.subr.bf16.mxu0 0
        %1303 = vmatpush2.bf16.msra.mxu0 0
        %1304 = vmatprep.subr.bf16.mxu0 0
        %1305 = vmatpush2.bf16.msra.mxu0 0
        %1306 = vmatprep.mubr.bf16.mxu0 0
        %1307 = vmatmul.mubr.bf16.gmra.mxu0 %v1269
        %v1308 = vpop.f32.mrf.mxu0
        %v1309 = vadd.f32 0.0, %v1308
        %v1310 = vpop.f32.mrf.mxu0
        %v1311 = vpop.f32.mrf.mxu0
        %v1312 = vpop.f32.mrf.mxu0
        %1313 = vdwg.mxu0
        %v1315 = vsel %vm1172, %v1219, 0
        %v1318 = vsel %vm1224, %v983, 0
        %1320 = vmatprep.subr.bf16.mxu0 0
        %1321 = vmatpush1.bf16.msra.mxu0 0
        %1322 = vmatprep.subr.bf16.mxu0 0
        %1323 = vmatpush1.bf16.msra.mxu0 0
        %1324 = vmatprep.subr.bf16.mxu0 0
        %1325 = vmatpush1.bf16.msra.mxu0 0
        %1326 = vmatprep.subr.bf16.mxu0 0
        %1327 = vmatpush1.bf16.msra.mxu0 0
        %1328 = vmatprep.subr.bf16.mxu0 0
        %1329 = vmatpush1.bf16.msra.mxu0 0
        %1330 = vmatprep.subr.bf16.mxu0 0
        %1331 = vmatpush1.bf16.msra.mxu0 0
        %1332 = vmatprep.subr.bf16.mxu0 0
        %1333 = vmatpush1.bf16.msra.mxu0 0
        %1334 = vmatprep.subr.bf16.mxu0 0
        %1335 = vmatpush1.bf16.msra.mxu0 %v1318
        %1336 = vmatprep.subr.bf16.mxu0 0
        %1337 = vmatpush2.bf16.msra.mxu0 0
        %1338 = vmatprep.subr.bf16.mxu0 0
        %1339 = vmatpush2.bf16.msra.mxu0 0
        %1340 = vmatprep.subr.bf16.mxu0 0
        %1341 = vmatpush2.bf16.msra.mxu0 0
        %1342 = vmatprep.subr.bf16.mxu0 0
        %1343 = vmatpush2.bf16.msra.mxu0 0
        %1344 = vmatprep.subr.bf16.mxu0 0
        %1345 = vmatpush2.bf16.msra.mxu0 0
        %1346 = vmatprep.subr.bf16.mxu0 0
        %1347 = vmatpush2.bf16.msra.mxu0 0
        %1348 = vmatprep.subr.bf16.mxu0 0
        %1349 = vmatpush2.bf16.msra.mxu0 0
        %1350 = vmatprep.subr.bf16.mxu0 0
        %1351 = vmatpush2.bf16.msra.mxu0 0
        %1352 = vmatprep.mubr.bf16.mxu0 0
        %1353 = vmatmul.mubr.bf16.gmra.mxu0 %v1315
        %v1354 = vpop.f32.mrf.mxu0
        %v1355 = vadd.f32 0.0, %v1354
        %v1356 = vpop.f32.mrf.mxu0
        %v1357 = vpop.f32.mrf.mxu0
        %v1358 = vpop.f32.mrf.mxu0
        %1359 = vdwg.mxu0
        %v1361 = vsel %vm1172, %v1220, 0
        %v1364 = vsel %vm1224, %v986, 0
        %1366 = vmatprep.subr.bf16.mxu0 0
        %1367 = vmatpush1.bf16.msra.mxu0 0
        %1368 = vmatprep.subr.bf16.mxu0 0
        %1369 = vmatpush1.bf16.msra.mxu0 0
        %1370 = vmatprep.subr.bf16.mxu0 0
        %1371 = vmatpush1.bf16.msra.mxu0 0
        %1372 = vmatprep.subr.bf16.mxu0 0
        %1373 = vmatpush1.bf16.msra.mxu0 0
        %1374 = vmatprep.subr.bf16.mxu0 0
        %1375 = vmatpush1.bf16.msra.mxu0 0
        %1376 = vmatprep.subr.bf16.mxu0 0
        %1377 = vmatpush1.bf16.msra.mxu0 0
        %1378 = vmatprep.subr.bf16.mxu0 0
        %1379 = vmatpush1.bf16.msra.mxu0 0
        %1380 = vmatprep.subr.bf16.mxu0 0
        %1381 = vmatpush1.bf16.msra.mxu0 %v1364
        %1382 = vmatprep.subr.bf16.mxu0 0
        %1383 = vmatpush2.bf16.msra.mxu0 0
        %1384 = vmatprep.subr.bf16.mxu0 0
        %1385 = vmatpush2.bf16.msra.mxu0 0
        %1386 = vmatprep.subr.bf16.mxu0 0
        %1387 = vmatpush2.bf16.msra.mxu0 0
        %1388 = vmatprep.subr.bf16.mxu0 0
        %1389 = vmatpush2.bf16.msra.mxu0 0
        %1390 = vmatprep.subr.bf16.mxu0 0
        %1391 = vmatpush2.bf16.msra.mxu0 0
        %1392 = vmatprep.subr.bf16.mxu0 0
        %1393 = vmatpush2.bf16.msra.mxu0 0
        %1394 = vmatprep.subr.bf16.mxu0 0
        %1395 = vmatpush2.bf16.msra.mxu0 0
        %1396 = vmatprep.subr.bf16.mxu0 0
        %1397 = vmatpush2.bf16.msra.mxu0 0
        %1398 = vmatprep.mubr.bf16.mxu0 0
        %1399 = vmatmul.mubr.bf16.gmra.mxu0 %v1361
        %v1400 = vpop.f32.mrf.mxu0
        %v1401 = vadd.f32 0.0, %v1400
        %v1402 = vpop.f32.mrf.mxu0
        %v1403 = vpop.f32.mrf.mxu0
        %v1404 = vpop.f32.mrf.mxu0
        %1405 = vdwg.mxu0
        %v1406 = vcombine.low %v1263, %v1355
        %v1407 = vcombine.high %v1263, %v1355
        %v1409 = vunpack.c.l.s4 1983009808
        %v1410 = vunpack.c.0.s8 %v1409
        %v1411 = vlaneseq
        %v1412 = vshrl.u32 %v1411, 7
        %v1413 = vsub.s32 %v1410, %v1412
        %v1414 = vrot.slane %v1406, %v1413
        %v1416 = vunpack.c.l.s4 1983009808
        %v1417 = vunpack.c.0.s8 %v1416
        %v1418 = vlaneseq
        %v1419 = vshrl.u32 %v1418, 7
        %v1420 = vsub.s32 %v1417, %v1419
        %v1421 = vrot.slane %v1407, %v1420
        %v1422 = vcombine.low %v1309, %v1401
        %v1423 = vcombine.high %v1309, %v1401
        %v1425 = vunpack.c.l.s4 1983009808
        %v1426 = vunpack.c.0.s8 %v1425
        %v1427 = vlaneseq
        %v1428 = vshrl.u32 %v1427, 7
        %v1429 = vsub.s32 %v1426, %v1428
        %v1430 = vrot.slane %v1422, %v1429
        %v1432 = vunpack.c.l.s4 1983009808
        %v1433 = vunpack.c.0.s8 %v1432
        %v1434 = vlaneseq
        %v1435 = vshrl.u32 %v1434, 7
        %v1436 = vsub.s32 %v1433, %v1435
        %v1437 = vrot.slane %v1423, %v1436
        %v1438 = vcombine.low %v1414, %v1430
        %v1439 = vcombine.high %v1414, %v1430
        %v1441 = vunpack.c.l.s4 1934713408
        %v1442 = vunpack.c.0.s8 %v1441
        %v1443 = vlaneseq
        %v1444 = vshrl.u32 %v1443, 7
        %v1445 = vsub.s32 %v1442, %v1444
        %v1446 = vrot.slane %v1438, %v1445
        %v1448 = vunpack.c.l.s4 1934713408
        %v1449 = vunpack.c.0.s8 %v1448
        %v1450 = vlaneseq
        %v1451 = vshrl.u32 %v1450, 7
        %v1452 = vsub.s32 %v1449, %v1451
        %v1453 = vrot.slane %v1439, %v1452
        %v1454 = vcombine.low %v1421, %v1437
        %v1455 = vcombine.high %v1421, %v1437
        %v1457 = vunpack.c.l.s4 1934713408
        %v1458 = vunpack.c.0.s8 %v1457
        %v1459 = vlaneseq
        %v1460 = vshrl.u32 %v1459, 7
        %v1461 = vsub.s32 %v1458, %v1460
        %v1462 = vrot.slane %v1454, %v1461
        %v1464 = vunpack.c.l.s4 1934713408
        %v1465 = vunpack.c.0.s8 %v1464
        %v1466 = vlaneseq
        %v1467 = vshrl.u32 %v1466, 7
        %v1468 = vsub.s32 %v1465, %v1467
        %v1469 = vrot.slane %v1455, %v1468
        %v1470 = vcombine.high %v1446, 0.0
        %v1471 = vcombine.high %v1453, 0.0
        %v1472 = vcombine.high %v1462, 0.0
        %v1473 = vcombine.high %v1469, 0.0
        %v1474 = vcombine.low %v1446, %v1453
        %v1476 = vunpack.c.l.s4 1983009808
        %v1477 = vunpack.c.0.s8 %v1476
        %v1478 = vlaneseq
        %v1479 = vshrl.u32 %v1478, 7
        %v1480 = vsub.s32 %v1477, %v1479
        %v1481 = vrot.slane %v1474, %v1480
        %v1482 = vcombine.low %v1470, %v1471
        %v1484 = vunpack.c.l.s4 1983009808
        %v1485 = vunpack.c.0.s8 %v1484
        %v1486 = vlaneseq
        %v1487 = vshrl.u32 %v1486, 7
        %v1488 = vsub.s32 %v1485, %v1487
        %v1489 = vrot.slane %v1482, %v1488
        %v1490 = vcombine.low %v1462, %v1469
        %v1492 = vunpack.c.l.s4 1983009808
        %v1493 = vunpack.c.0.s8 %v1492
        %v1494 = vlaneseq
        %v1495 = vshrl.u32 %v1494, 7
        %v1496 = vsub.s32 %v1493, %v1495
        %v1497 = vrot.slane %v1490, %v1496
        %v1498 = vcombine.low %v1472, %v1473
        %v1500 = vunpack.c.l.s4 1983009808
        %v1501 = vunpack.c.0.s8 %v1500
        %v1502 = vlaneseq
        %v1503 = vshrl.u32 %v1502, 7
        %v1504 = vsub.s32 %v1501, %v1503
        %v1505 = vrot.slane %v1498, %v1504
        %v1506 = vcombine.low %v1481, %v1489
        %v1507 = vcombine.high %v1481, %v1489
        %v1509 = vunpack.c.l.s4 1934713408
        %v1510 = vunpack.c.0.s8 %v1509
        %v1511 = vlaneseq
        %v1512 = vshrl.u32 %v1511, 7
        %v1513 = vsub.s32 %v1510, %v1512
        %v1514 = vrot.slane %v1506, %v1513
        %v1516 = vunpack.c.l.s4 1934713408
        %v1517 = vunpack.c.0.s8 %v1516
        %v1518 = vlaneseq
        %v1519 = vshrl.u32 %v1518, 7
        %v1520 = vsub.s32 %v1517, %v1519
        %v1521 = vrot.slane %v1507, %v1520
        %v1522 = vcombine.low %v1497, %v1505
        %v1523 = vcombine.high %v1497, %v1505
        %v1525 = vunpack.c.l.s4 1934713408
        %v1526 = vunpack.c.0.s8 %v1525
        %v1527 = vlaneseq
        %v1528 = vshrl.u32 %v1527, 7
        %v1529 = vsub.s32 %v1526, %v1528
        %v1530 = vrot.slane %v1522, %v1529
        %v1532 = vunpack.c.l.s4 1934713408
        %v1533 = vunpack.c.0.s8 %v1532
        %v1534 = vlaneseq
        %v1535 = vshrl.u32 %v1534, 7
        %v1536 = vsub.s32 %v1533, %v1535
        %v1537 = vrot.slane %v1523, %v1536
        %v1538 = vcombine.low %v1514, %v1530
        %v1539 = vcombine.high %v1514, %v1530
        %v1540 = vcombine.low %v1521, %v1537
        %v1541 = vcombine.high %v1521, %v1537
        %1543 = vrot.lane.b32.xlu0 %v1539, 16
        %v1544 = vpop.permute.xlu0 %1543
        %1547 = vrot.lane.b32.xlu0 %v1540, 32
        %v1548 = vpop.permute.xlu0 %1547
        %1551 = vrot.lane.b32.xlu0 %v1541, 48
        %v1552 = vpop.permute.xlu0 %1551
        %v1554 = vsel %vm987, %v1538, %v1544
        %vm1555 = vcmask 261120
        %v1556 = vsel %vm1555, %v1554, %v1548
        %vm1557 = vcmask 392192
        %v1558 = vsel %vm1557, %v1556, %v1552
        %1559 = vst.msk [vmem:[%s256] sm:$0xff] %vm292, %v1558
        %s1560 = sand.u32 %s120, 1
        %s1561 = scalar_lea.sflag [#allocation4], %s1560
        %s1562 = sand.u32 %s120, 1
        %s1563 = smul.addr %s1562, 8
        %s1564 = scalar_lea.vmem [#allocation10], %s1563
        // Predicated region
        $region53: #{tpu_custom_call.1} parent=35 // pred_check
          %p1565 = pneg %p130
        $region54: #{tpu_custom_call.1} parent=35 // pred_check_branch
          %1567 = sbr.rel (%p1565) target = $region56
        $region55: #{tpu_custom_call.1} parent=35 // pred_region
          %s1569 = ssub.s32 128, 128
          %1570 = vsyncadd %s1561, %s1569
          %s1571 = smul.addr %s23, 128
          %s1572 = scalar_lea.hbm %s4, %s1571
          %s1574 = sshll.u32 %s1564, 4
          %s1575 = int_to_ptr.vmem [resolvable:$true] %s1574
          %1577 = dma.vmem_to_hbm [thread:$0]  %s1575, 128, %s1572, %s1561
        $region56: #{tpu_custom_call.1} parent=35 // pred_fallthru
          _
      $region36: #{tpu_custom_call.1} parent=5 // pred_fallthru
        _
      %p1578 = scmp.le.s32.totalorder 2, %s18
      // Predicated region
      $region57: #{tpu_custom_call.1} parent=5 // pred_check
        %p1579 = pneg %p1578
      $region58: #{tpu_custom_call.1} parent=5 // pred_check_branch
        %1581 = sbr.rel (%p1579) target = $region60
      $region59: #{tpu_custom_call.1} parent=5 // pred_region
        %s1582 = ssub.s32 %s18, 2
        // Predicated region
        $region61: #{tpu_custom_call.1} parent=59 // pred_check
          %p1583 = pneg %p136
        $region62: #{tpu_custom_call.1} parent=59 // pred_check_branch
          %1585 = sbr.rel (%p1583) target = $region64
        $region63: #{tpu_custom_call.1} parent=59 // pred_region
          %s1586 = sand.u32 %s121, 1
          %s1587 = scalar_lea.sflag [#allocation4], %s1586
          %s1588 = sand.u32 %s121, 1
          %s1589 = smul.addr %s1588, 8
          %s1590 = scalar_lea.vmem [#allocation10], %s1589
          %1591 = dma.done %s1587, 128
        $region64: #{tpu_custom_call.1} parent=59 // pred_fallthru
          _
      $region60: #{tpu_custom_call.1} parent=5 // pred_fallthru
        _
    $region6: #{tpu_custom_call.1} parent=1 // loop_footer
      %s22 = sadd.s32 1, %s18
    $region7: #{tpu_custom_call.1} parent=1 // loop_footer_branch
      %17 = sbr.rel target = $region3
    $region8: #{tpu_custom_call.1} parent=1 // loop_exit
      _
    %1592 = vsyncpa [#allocation3], 1
    %s1593 = scalar_lea.sflag [#allocation3], 1
    %1594 = vsyncpa %s1593, 1
    %1595 = vsyncpa [#allocation6], 1
    %1596 = vsyncpa [#allocation9], 1
    %1597 = vsyncpa [#allocation4], 1
    %s1598 = scalar_lea.sflag [#allocation4], 1
    %1599 = vsyncpa %s1598, 1

</llo_original>
